<compile_context>
chip_gen: v7x
topology: tpu7x:2x2x1
jax: 0.10.0
libtpu: 0.0.40
codegen_flags: <defaults>
</compile_context>

<pallas_src>
import functools

import jax
import jax.numpy as jnp
from jax.experimental import pallas as pl
from jax.experimental.pallas import tpu as pltpu  # noqa: F401  (compiler params if scaled up)


# --------------------------- fused Pallas kernel -----------------------------

def _fused_kernel(cols_ref, cw_ref, cb_ref, pool_ref, fw_ref, fb_ref,
                  e2_ref, wih_ref, b2_ref, whh_ref, mask_ref,
                  img_ref, txt_ref, *, seq_len, batch, hidden):
    """Single-launch fused forward for both branches (everything VMEM-resident)."""
    # ------------------------------ image branch -----------------------------
    conv = jnp.maximum(
        jnp.dot(cols_ref[...], cw_ref[...], preferred_element_type=jnp.float32)
        + cb_ref[...], 0.0)                                          # (N*HW, Cc)
    # Global average pool as an MXU contraction with a block-averaging matrix.
    pooled = jnp.dot(pool_ref[...], conv,
                     preferred_element_type=jnp.float32)             # (N, Cc)
    img_ref[...] = (jnp.dot(pooled, fw_ref[...],
                            preferred_element_type=jnp.float32) + fb_ref[...])

    # ------------------------------ text branch ------------------------------
    T, B, H = seq_len, batch, hidden
    H2 = 2 * H

    # Fused input projection for BOTH directions: block-diagonal weights with
    # gate columns direction-interleaved [i_f i_b | f_f f_b | g_f g_b | o_f o_b].
    x2 = (jnp.dot(e2_ref[...], wih_ref[...],
                  preferred_element_type=jnp.float32) + b2_ref[...])  # (T*B, 8H)
    whh = whh_ref[...]                                                 # (2H, 8H)
    mask = mask_ref[...]                                               # (T*B, 1) one-hot

    def cell(g, c):
        # PyTorch gate order (i, f, g, o); each gate block is 2H wide (fwd|bwd).
        # Two EUP activations over the full 8H gate vector, then static slices.
        sg = jax.nn.sigmoid(g)
        th = jnp.tanh(g)
        c_new = sg[:, H2:2 * H2] * c + sg[:, :H2] * th[:, 2 * H2:3 * H2]
        h_new = sg[:, 3 * H2:4 * H2] * jnp.tanh(c_new)
        return h_new, c_new

    # t = 0: h_0 == 0, so the recurrent matmul is skipped exactly.
    h, c = cell(x2[:B, :], jnp.zeros((B, H2), jnp.float32))
    s = mask[:B, :] * h
    for t in range(1, T):   # small static T -> fully unrolled, static slices
        g = x2[t * B:(t + 1) * B, :] + jnp.dot(
            h, whh, preferred_element_type=jnp.float32)
        h, c = cell(g, c)
        s = s + mask[t * B:(t + 1) * B, :] * h    # one-hot capture of last valid h
    txt_ref[...] = s                              # packed [h_f_last | h_b_last]


# --------------------------- parameters --------------------------------------

def init_params(key, *, in_ch=3, conv_ch=32, img_embed=64,
                vocab=20, emb_dim=32, hidden=32):
    # img_embed=64 stands in for MobileNetV2's 1280-d feature at small scale.
    ks = jax.random.split(key, 7)
    p = {}
    p["conv_w"] = 0.1 * jax.random.normal(ks[0], (3 * 3 * in_ch, conv_ch), jnp.float32)
    p["conv_b"] = jnp.zeros((conv_ch,), jnp.float32)
    p["fc_w"] = 0.1 * jax.random.normal(ks[1], (conv_ch, img_embed), jnp.float32)
    p["fc_b"] = jnp.zeros((img_embed,), jnp.float32)
    p["emb"] = 0.1 * jax.random.normal(ks[2], (vocab, emb_dim), jnp.float32)
    # LSTM weights stored pre-transposed for x @ W; gate order (i, f, g, o).
    # TODO(synk): when loading real nn.LSTM weights, sum b_ih + b_hh into b_*.
    p["wih_f"] = 0.1 * jax.random.normal(ks[3], (emb_dim, 4 * hidden), jnp.float32)
    p["whh_f"] = 0.1 * jax.random.normal(ks[4], (hidden, 4 * hidden), jnp.float32)
    p["b_f"] = jnp.zeros((4 * hidden,), jnp.float32)
    p["wih_b"] = 0.1 * jax.random.normal(ks[5], (emb_dim, 4 * hidden), jnp.float32)
    p["whh_b"] = 0.1 * jax.random.normal(ks[6], (hidden, 4 * hidden), jnp.float32)
    p["b_b"] = jnp.zeros((4 * hidden,), jnp.float32)
    return p


def _pack_dir_blockdiag(w_f, w_b, hidden):
    """(K,4H),(K,4H) -> (2K,8H) block-diagonal weight with gate columns
    direction-interleaved: [i_f i_b | f_f f_b | g_f g_b | o_f o_b]."""
    K = w_f.shape[0]
    wf = w_f.reshape(K, 4, 1, hidden)
    wb = w_b.reshape(K, 4, 1, hidden)
    z = jnp.zeros_like(wf)
    top = jnp.concatenate([wf, z], axis=2).reshape(K, 8 * hidden)
    bot = jnp.concatenate([z, wb], axis=2).reshape(K, 8 * hidden)
    return jnp.concatenate([top, bot], axis=0)


def _pack_dir_bias(b_f, b_b, hidden):
    bf = b_f.reshape(4, 1, hidden)
    bb = b_b.reshape(4, 1, hidden)
    return jnp.concatenate([bf, bb], axis=1).reshape(1, 8 * hidden)


def pack_params(p):
    """One-time repack of PyTorch-layout params into the fused-kernel layout."""
    hidden = p["whh_f"].shape[0]
    conv_k = p["conv_w"].shape[0]                        # 9 * in_ch = 27
    k_pad = 8 * pl.cdiv(conv_k, 8)                       # pad K 27 -> 32 (sublane tile)
    e = p["fc_b"].shape[0]
    e_pad = 128 * pl.cdiv(e, 128)                        # lane-dense fc output
    return {
        "conv_w": jnp.pad(p["conv_w"], ((0, k_pad - conv_k), (0, 0))),
        "conv_b": p["conv_b"].reshape(1, -1),
        "fc_w": jnp.pad(p["fc_w"], ((0, 0), (0, e_pad - e))),
        "fc_b": jnp.pad(p["fc_b"], (0, e_pad - e)).reshape(1, e_pad),
        "emb": p["emb"],
        "wih2": _pack_dir_blockdiag(p["wih_f"], p["wih_b"], hidden),   # (2D, 8H)
        "whh2": _pack_dir_blockdiag(p["whh_f"], p["whh_b"], hidden),   # (2H, 8H)
        "b2": _pack_dir_bias(p["b_f"], p["b_b"], hidden),              # (1, 8H)
    }


# --------------------------- model forward -----------------------------------

def make_forward(img_embed):
    @jax.jit
    def model_forward(kp, images, text, text_length):
        # ------------------- image branch glue (XLA) -------------------------
        # PyTorch conv input is NCHW; transpose to NHWC.
        x = jnp.transpose(images, (0, 2, 3, 1)).astype(jnp.float32)    # (N,H,W,C)
        N, Hh, Ww, C = x.shape
        HW = Hh * Ww
        # im2col (3x3, stride 1, pad 1) — wrapper glue at this toy size.
        # TODO(synk): at real MobileNetV2/ResNet widths, tile NHWC with a grid +
        # BlockSpec (or shifted in-kernel taps) instead of XLA im2col: the 9x
        # HBM expansion and double-buffered cols tiles won't fit v7x's 64 MiB
        # VMEM; full backbone depth is out of scope for this kernel.
        xp = jnp.pad(x, ((0, 0), (1, 1), (1, 1), (0, 0)))
        patches = [xp[:, i:i + Hh, j:j + Ww, :] for i in range(3) for j in range(3)]
        cols = jnp.concatenate(patches, axis=-1).reshape(N * HW, 9 * C)
        k_pad = kp["conv_w"].shape[0]
        cols = jnp.pad(cols, ((0, 0), (0, k_pad - 9 * C)))             # K 27 -> 32
        # Block-averaging matrix so the global pool rides the MXU in-kernel.
        pool = jnp.kron(jnp.eye(N, dtype=jnp.float32),
                        jnp.full((1, HW), 1.0 / HW, jnp.float32))       # (N, N*HW)

        # ------------------- text branch glue (XLA) --------------------------
        B, T = text.shape
        H = kp["whh2"].shape[0] // 2
        D = kp["emb"].shape[1]
        # Reverse each sequence within its valid length for the backward
        # direction (pack_padded_sequence semantics).
        t_idx = jnp.arange(T)[None, :]
        L = text_length[:, None]
        rev_idx = jnp.where(t_idx < L, L - 1 - t_idx, t_idx)            # (B, T)
        text_rev = jnp.take_along_axis(text, rev_idx, axis=1)
        # Time-major embeddings packed (T*B, 2D): one matmul projects both
        # directions through the block-diagonal wih2.
        emb_f = kp["emb"][text.T].reshape(T * B, D)
        emb_b = kp["emb"][text_rev.T].reshape(T * B, D)
        e2 = jnp.concatenate([emb_f, emb_b], axis=-1)                   # (T*B, 2D)
        # f32 one-hot capture mask of the last valid timestep, time-major.
        mask = (jnp.arange(T)[:, None] == (text_length - 1)[None, :]
                ).astype(jnp.float32).reshape(T * B, 1)

        e_pad = kp["fc_b"].shape[1]
        img_out, txt_out = pl.pallas_call(
            functools.partial(_fused_kernel, seq_len=T, batch=B, hidden=H),
            out_shape=(jax.ShapeDtypeStruct((N, e_pad), jnp.float32),
                       jax.ShapeDtypeStruct((B, 2 * H), jnp.float32)),
        )(cols, kp["conv_w"], kp["conv_b"], pool, kp["fc_w"], kp["fc_b"],
          e2, kp["wih2"], kp["b2"], kp["whh2"], mask)
        # TODO(synk): on v7x, split the two independent branches across the two
        # TensorCores with grid=(2,), dimension_semantics=("parallel",) and
        # pl.when dispatch on pl.program_id(0).
        return img_out[:, :img_embed], txt_out                          # (N, E), (B, 2H)

    return model_forward


# --------------------------- main ---------------------------------------------

if __name__ == "__main__":
    key = jax.random.PRNGKey(0)
    k_img, k_txt, k_par = jax.random.split(key, 3)

    B, C_IN, HW = 2, 3, 16
    T, VOCAB = 8, 20

    images = jax.random.normal(k_img, (B, C_IN, HW, HW), jnp.float32)   # NCHW (PyTorch)
    text = jax.random.randint(k_txt, (B, T), 0, VOCAB, jnp.int32)
    text_length = jnp.array([T, 5], dtype=jnp.int32)

    params = init_params(k_par)
    kparams = pack_params(params)
    forward = make_forward(img_embed=params["fc_b"].shape[0])

    img_emb, txt_emb = forward(kparams, images, text, text_length)
    jax.block_until_ready((img_emb, txt_emb))

    assert img_emb.shape == (B, 64)
    assert txt_emb.shape == (B, 64)   # 2 * hidden
    print("KERNEL_OK")
</pallas_src>

<mosaic_0001>
module attributes {stable_mosaic.version = 11 : i64} {
  func.func @_fused_kernel(%arg0: memref<512x32xf32, #tpu.memory_space<vmem>>, %arg1: memref<32x32xf32, #tpu.memory_space<vmem>>, %arg2: memref<1x32xf32, #tpu.memory_space<vmem>>, %arg3: memref<2x512xf32, #tpu.memory_space<vmem>>, %arg4: memref<32x128xf32, #tpu.memory_space<vmem>>, %arg5: memref<1x128xf32, #tpu.memory_space<vmem>>, %arg6: memref<16x64xf32, #tpu.memory_space<vmem>>, %arg7: memref<64x256xf32, #tpu.memory_space<vmem>>, %arg8: memref<1x256xf32, #tpu.memory_space<vmem>>, %arg9: memref<64x256xf32, #tpu.memory_space<vmem>>, %arg10: memref<16x1xf32, #tpu.memory_space<vmem>>, %arg11: memref<2x128xf32, #tpu.memory_space<vmem>>, %arg12: memref<2x64xf32, #tpu.memory_space<vmem>>) attributes {dimension_semantics = [], scalar_prefetch = 0 : i64, scratch_operands = 0 : i64, tpu.core_type = #tpu.core_type<tc>} {
    %c0 = arith.constant 0 : index
    %c0_0 = arith.constant 0 : index
    %0 = vector.load %arg0[%c0, %c0_0] : memref<512x32xf32, #tpu.memory_space<vmem>>, vector<512x32xf32>
    %c0_1 = arith.constant 0 : index
    %c0_2 = arith.constant 0 : index
    %1 = vector.load %arg1[%c0_1, %c0_2] : memref<32x32xf32, #tpu.memory_space<vmem>>, vector<32x32xf32>
    %cst = arith.constant dense<0.000000e+00> : vector<512x32xf32>
    %2 = tpu.matmul %0, %1, %cst {dimension_numbers = #tpu.dot_dimension_numbers<[1], [0], [0], [1], [0, 0, 1, 1], [], []>} : vector<512x32xf32>, vector<32x32xf32>, vector<512x32xf32> -> vector<512x32xf32>
    %c0_3 = arith.constant 0 : index
    %c0_4 = arith.constant 0 : index
    %3 = vector.load %arg2[%c0_3, %c0_4] : memref<1x32xf32, #tpu.memory_space<vmem>>, vector<1x32xf32>
    %4 = vector.broadcast %3 : vector<1x32xf32> to vector<512x32xf32>
    %5 = arith.addf %2, %4 : vector<512x32xf32>
    %cst_5 = arith.constant 0.000000e+00 : f32
    %6 = vector.broadcast %cst_5 : f32 to vector<512x32xf32>
    %7 = arith.maximumf %5, %6 : vector<512x32xf32>
    %c0_6 = arith.constant 0 : index
    %c0_7 = arith.constant 0 : index
    %8 = vector.load %arg3[%c0_6, %c0_7] : memref<2x512xf32, #tpu.memory_space<vmem>>, vector<2x512xf32>
    %cst_8 = arith.constant dense<0.000000e+00> : vector<2x32xf32>
    %9 = tpu.matmul %8, %7, %cst_8 {dimension_numbers = #tpu.dot_dimension_numbers<[1], [0], [0], [1], [0, 0, 1, 1], [], []>} : vector<2x512xf32>, vector<512x32xf32>, vector<2x32xf32> -> vector<2x32xf32>
    %c0_9 = arith.constant 0 : index
    %c0_10 = arith.constant 0 : index
    %10 = vector.load %arg4[%c0_9, %c0_10] : memref<32x128xf32, #tpu.memory_space<vmem>>, vector<32x128xf32>
    %cst_11 = arith.constant dense<0.000000e+00> : vector<2x128xf32>
    %11 = tpu.matmul %9, %10, %cst_11 {dimension_numbers = #tpu.dot_dimension_numbers<[1], [0], [0], [1], [0, 0, 1, 1], [], []>} : vector<2x32xf32>, vector<32x128xf32>, vector<2x128xf32> -> vector<2x128xf32>
    %c0_12 = arith.constant 0 : index
    %c0_13 = arith.constant 0 : index
    %12 = vector.load %arg5[%c0_12, %c0_13] : memref<1x128xf32, #tpu.memory_space<vmem>>, vector<1x128xf32>
    %13 = vector.broadcast %12 : vector<1x128xf32> to vector<2x128xf32>
    %14 = arith.addf %11, %13 : vector<2x128xf32>
    %c0_14 = arith.constant 0 : index
    %c0_15 = arith.constant 0 : index
    %15 = vector.load %arg11[%c0_14, %c0_15] : memref<2x128xf32, #tpu.memory_space<vmem>>, vector<2x128xf32>
    tpu.vector_store %arg11[%c0_14, %c0_15], %14 {strides = array<i32>} : memref<2x128xf32, #tpu.memory_space<vmem>>, vector<2x128xf32>,
    %c0_16 = arith.constant 0 : index
    %c0_17 = arith.constant 0 : index
    %16 = vector.load %arg6[%c0_16, %c0_17] : memref<16x64xf32, #tpu.memory_space<vmem>>, vector<16x64xf32>
    %c0_18 = arith.constant 0 : index
    %c0_19 = arith.constant 0 : index
    %17 = vector.load %arg7[%c0_18, %c0_19] : memref<64x256xf32, #tpu.memory_space<vmem>>, vector<64x256xf32>
    %cst_20 = arith.constant dense<0.000000e+00> : vector<16x256xf32>
    %18 = tpu.matmul %16, %17, %cst_20 {dimension_numbers = #tpu.dot_dimension_numbers<[1], [0], [0], [1], [0, 0, 1, 1], [], []>} : vector<16x64xf32>, vector<64x256xf32>, vector<16x256xf32> -> vector<16x256xf32>
    %c0_21 = arith.constant 0 : index
    %c0_22 = arith.constant 0 : index
    %19 = vector.load %arg8[%c0_21, %c0_22] : memref<1x256xf32, #tpu.memory_space<vmem>>, vector<1x256xf32>
    %20 = vector.broadcast %19 : vector<1x256xf32> to vector<16x256xf32>
    %21 = arith.addf %18, %20 : vector<16x256xf32>
    %c0_23 = arith.constant 0 : index
    %c0_24 = arith.constant 0 : index
    %22 = vector.load %arg9[%c0_23, %c0_24] : memref<64x256xf32, #tpu.memory_space<vmem>>, vector<64x256xf32>
    %c0_25 = arith.constant 0 : index
    %c0_26 = arith.constant 0 : index
    %23 = vector.load %arg10[%c0_25, %c0_26] : memref<16x1xf32, #tpu.memory_space<vmem>>, vector<16x1xf32>
    %24 = vector.extract_strided_slice %21 {offsets = [0, 0], sizes = [2, 256], strides = [1, 1]} : vector<16x256xf32> to vector<2x256xf32>
    %cst_27 = arith.constant 0.000000e+00 : f32
    %25 = vector.broadcast %cst_27 : f32 to vector<2x64xf32>
    %26 = arith.negf %24 : vector<2x256xf32>
    %27 = math.exp %26 : vector<2x256xf32>
    %cst_28 = arith.constant 1.000000e+00 : f32
    %28 = vector.broadcast %cst_28 : f32 to vector<2x256xf32>
    %29 = arith.addf %28, %27 : vector<2x256xf32>
    %30 = arith.divf %28, %29 : vector<2x256xf32>
    %31 = math.tanh %24 : vector<2x256xf32>
    %32 = vector.extract_strided_slice %30 {offsets = [0, 64], sizes = [2, 64], strides = [1, 1]} : vector<2x256xf32> to vector<2x64xf32>
    %33 = arith.mulf %32, %25 : vector<2x64xf32>
    %34 = vector.extract_strided_slice %30 {offsets = [0, 0], sizes = [2, 64], strides = [1, 1]} : vector<2x256xf32> to vector<2x64xf32>
    %35 = vector.extract_strided_slice %31 {offsets = [0, 128], sizes = [2, 64], strides = [1, 1]} : vector<2x256xf32> to vector<2x64xf32>
    %36 = arith.mulf %34, %35 : vector<2x64xf32>
    %37 = arith.addf %33, %36 : vector<2x64xf32>
    %38 = vector.extract_strided_slice %30 {offsets = [0, 192], sizes = [2, 64], strides = [1, 1]} : vector<2x256xf32> to vector<2x64xf32>
    %39 = math.tanh %37 : vector<2x64xf32>
    %40 = arith.mulf %38, %39 : vector<2x64xf32>
    %41 = vector.extract_strided_slice %23 {offsets = [0, 0], sizes = [2, 1], strides = [1, 1]} : vector<16x1xf32> to vector<2x1xf32>
    %42 = vector.broadcast %41 : vector<2x1xf32> to vector<2x64xf32>
    %43 = arith.mulf %42, %40 : vector<2x64xf32>
    %44 = vector.extract_strided_slice %21 {offsets = [2, 0], sizes = [2, 256], strides = [1, 1]} : vector<16x256xf32> to vector<2x256xf32>
    %cst_29 = arith.constant dense<0.000000e+00> : vector<2x256xf32>
    %45 = tpu.matmul %40, %22, %cst_29 {dimension_numbers = #tpu.dot_dimension_numbers<[1], [0], [0], [1], [0, 0, 1, 1], [], []>} : vector<2x64xf32>, vector<64x256xf32>, vector<2x256xf32> -> vector<2x256xf32>
    %46 = arith.addf %44, %45 : vector<2x256xf32>
    %47 = arith.negf %46 : vector<2x256xf32>
    %48 = math.exp %47 : vector<2x256xf32>
    %cst_30 = arith.constant 1.000000e+00 : f32
    %49 = vector.broadcast %cst_30 : f32 to vector<2x256xf32>
    %50 = arith.addf %49, %48 : vector<2x256xf32>
    %51 = arith.divf %49, %50 : vector<2x256xf32>
    %52 = math.tanh %46 : vector<2x256xf32>
    %53 = vector.extract_strided_slice %51 {offsets = [0, 64], sizes = [2, 64], strides = [1, 1]} : vector<2x256xf32> to vector<2x64xf32>
    %54 = arith.mulf %53, %37 : vector<2x64xf32>
    %55 = vector.extract_strided_slice %51 {offsets = [0, 0], sizes = [2, 64], strides = [1, 1]} : vector<2x256xf32> to vector<2x64xf32>
    %56 = vector.extract_strided_slice %52 {offsets = [0, 128], sizes = [2, 64], strides = [1, 1]} : vector<2x256xf32> to vector<2x64xf32>
    %57 = arith.mulf %55, %56 : vector<2x64xf32>
    %58 = arith.addf %54, %57 : vector<2x64xf32>
    %59 = vector.extract_strided_slice %51 {offsets = [0, 192], sizes = [2, 64], strides = [1, 1]} : vector<2x256xf32> to vector<2x64xf32>
    %60 = math.tanh %58 : vector<2x64xf32>
    %61 = arith.mulf %59, %60 : vector<2x64xf32>
    %62 = vector.extract_strided_slice %23 {offsets = [2, 0], sizes = [2, 1], strides = [1, 1]} : vector<16x1xf32> to vector<2x1xf32>
    %63 = vector.broadcast %62 : vector<2x1xf32> to vector<2x64xf32>
    %64 = arith.mulf %63, %61 : vector<2x64xf32>
    %65 = arith.addf %43, %64 : vector<2x64xf32>
    %66 = vector.extract_strided_slice %21 {offsets = [4, 0], sizes = [2, 256], strides = [1, 1]} : vector<16x256xf32> to vector<2x256xf32>
    %cst_31 = arith.constant dense<0.000000e+00> : vector<2x256xf32>
    %67 = tpu.matmul %61, %22, %cst_31 {dimension_numbers = #tpu.dot_dimension_numbers<[1], [0], [0], [1], [0, 0, 1, 1], [], []>} : vector<2x64xf32>, vector<64x256xf32>, vector<2x256xf32> -> vector<2x256xf32>
    %68 = arith.addf %66, %67 : vector<2x256xf32>
    %69 = arith.negf %68 : vector<2x256xf32>
    %70 = math.exp %69 : vector<2x256xf32>
    %cst_32 = arith.constant 1.000000e+00 : f32
    %71 = vector.broadcast %cst_32 : f32 to vector<2x256xf32>
    %72 = arith.addf %71, %70 : vector<2x256xf32>
    %73 = arith.divf %71, %72 : vector<2x256xf32>
    %74 = math.tanh %68 : vector<2x256xf32>
    %75 = vector.extract_strided_slice %73 {offsets = [0, 64], sizes = [2, 64], strides = [1, 1]} : vector<2x256xf32> to vector<2x64xf32>
    %76 = arith.mulf %75, %58 : vector<2x64xf32>
    %77 = vector.extract_strided_slice %73 {offsets = [0, 0], sizes = [2, 64], strides = [1, 1]} : vector<2x256xf32> to vector<2x64xf32>
    %78 = vector.extract_strided_slice %74 {offsets = [0, 128], sizes = [2, 64], strides = [1, 1]} : vector<2x256xf32> to vector<2x64xf32>
    %79 = arith.mulf %77, %78 : vector<2x64xf32>
    %80 = arith.addf %76, %79 : vector<2x64xf32>
    %81 = vector.extract_strided_slice %73 {offsets = [0, 192], sizes = [2, 64], strides = [1, 1]} : vector<2x256xf32> to vector<2x64xf32>
    %82 = math.tanh %80 : vector<2x64xf32>
    %83 = arith.mulf %81, %82 : vector<2x64xf32>
    %84 = vector.extract_strided_slice %23 {offsets = [4, 0], sizes = [2, 1], strides = [1, 1]} : vector<16x1xf32> to vector<2x1xf32>
    %85 = vector.broadcast %84 : vector<2x1xf32> to vector<2x64xf32>
    %86 = arith.mulf %85, %83 : vector<2x64xf32>
    %87 = arith.addf %65, %86 : vector<2x64xf32>
    %88 = vector.extract_strided_slice %21 {offsets = [6, 0], sizes = [2, 256], strides = [1, 1]} : vector<16x256xf32> to vector<2x256xf32>
    %cst_33 = arith.constant dense<0.000000e+00> : vector<2x256xf32>
    %89 = tpu.matmul %83, %22, %cst_33 {dimension_numbers = #tpu.dot_dimension_numbers<[1], [0], [0], [1], [0, 0, 1, 1], [], []>} : vector<2x64xf32>, vector<64x256xf32>, vector<2x256xf32> -> vector<2x256xf32>
    %90 = arith.addf %88, %89 : vector<2x256xf32>
    %91 = arith.negf %90 : vector<2x256xf32>
    %92 = math.exp %91 : vector<2x256xf32>
    %cst_34 = arith.constant 1.000000e+00 : f32
    %93 = vector.broadcast %cst_34 : f32 to vector<2x256xf32>
    %94 = arith.addf %93, %92 : vector<2x256xf32>
    %95 = arith.divf %93, %94 : vector<2x256xf32>
    %96 = math.tanh %90 : vector<2x256xf32>
    %97 = vector.extract_strided_slice %95 {offsets = [0, 64], sizes = [2, 64], strides = [1, 1]} : vector<2x256xf32> to vector<2x64xf32>
    %98 = arith.mulf %97, %80 : vector<2x64xf32>
    %99 = vector.extract_strided_slice %95 {offsets = [0, 0], sizes = [2, 64], strides = [1, 1]} : vector<2x256xf32> to vector<2x64xf32>
    %100 = vector.extract_strided_slice %96 {offsets = [0, 128], sizes = [2, 64], strides = [1, 1]} : vector<2x256xf32> to vector<2x64xf32>
    %101 = arith.mulf %99, %100 : vector<2x64xf32>
    %102 = arith.addf %98, %101 : vector<2x64xf32>
    %103 = vector.extract_strided_slice %95 {offsets = [0, 192], sizes = [2, 64], strides = [1, 1]} : vector<2x256xf32> to vector<2x64xf32>
    %104 = math.tanh %102 : vector<2x64xf32>
    %105 = arith.mulf %103, %104 : vector<2x64xf32>
    %106 = vector.extract_strided_slice %23 {offsets = [6, 0], sizes = [2, 1], strides = [1, 1]} : vector<16x1xf32> to vector<2x1xf32>
    %107 = vector.broadcast %106 : vector<2x1xf32> to vector<2x64xf32>
    %108 = arith.mulf %107, %105 : vector<2x64xf32>
    %109 = arith.addf %87, %108 : vector<2x64xf32>
    %110 = vector.extract_strided_slice %21 {offsets = [8, 0], sizes = [2, 256], strides = [1, 1]} : vector<16x256xf32> to vector<2x256xf32>
    %cst_35 = arith.constant dense<0.000000e+00> : vector<2x256xf32>
    %111 = tpu.matmul %105, %22, %cst_35 {dimension_numbers = #tpu.dot_dimension_numbers<[1], [0], [0], [1], [0, 0, 1, 1], [], []>} : vector<2x64xf32>, vector<64x256xf32>, vector<2x256xf32> -> vector<2x256xf32>
    %112 = arith.addf %110, %111 : vector<2x256xf32>
    %113 = arith.negf %112 : vector<2x256xf32>
    %114 = math.exp %113 : vector<2x256xf32>
    %cst_36 = arith.constant 1.000000e+00 : f32
    %115 = vector.broadcast %cst_36 : f32 to vector<2x256xf32>
    %116 = arith.addf %115, %114 : vector<2x256xf32>
    %117 = arith.divf %115, %116 : vector<2x256xf32>
    %118 = math.tanh %112 : vector<2x256xf32>
    %119 = vector.extract_strided_slice %117 {offsets = [0, 64], sizes = [2, 64], strides = [1, 1]} : vector<2x256xf32> to vector<2x64xf32>
    %120 = arith.mulf %119, %102 : vector<2x64xf32>
    %121 = vector.extract_strided_slice %117 {offsets = [0, 0], sizes = [2, 64], strides = [1, 1]} : vector<2x256xf32> to vector<2x64xf32>
    %122 = vector.extract_strided_slice %118 {offsets = [0, 128], sizes = [2, 64], strides = [1, 1]} : vector<2x256xf32> to vector<2x64xf32>
    %123 = arith.mulf %121, %122 : vector<2x64xf32>
    %124 = arith.addf %120, %123 : vector<2x64xf32>
    %125 = vector.extract_strided_slice %117 {offsets = [0, 192], sizes = [2, 64], strides = [1, 1]} : vector<2x256xf32> to vector<2x64xf32>
    %126 = math.tanh %124 : vector<2x64xf32>
    %127 = arith.mulf %125, %126 : vector<2x64xf32>
    %128 = vector.extract_strided_slice %23 {offsets = [8, 0], sizes = [2, 1], strides = [1, 1]} : vector<16x1xf32> to vector<2x1xf32>
    %129 = vector.broadcast %128 : vector<2x1xf32> to vector<2x64xf32>
    %130 = arith.mulf %129, %127 : vector<2x64xf32>
    %131 = arith.addf %109, %130 : vector<2x64xf32>
    %132 = vector.extract_strided_slice %21 {offsets = [10, 0], sizes = [2, 256], strides = [1, 1]} : vector<16x256xf32> to vector<2x256xf32>
    %cst_37 = arith.constant dense<0.000000e+00> : vector<2x256xf32>
    %133 = tpu.matmul %127, %22, %cst_37 {dimension_numbers = #tpu.dot_dimension_numbers<[1], [0], [0], [1], [0, 0, 1, 1], [], []>} : vector<2x64xf32>, vector<64x256xf32>, vector<2x256xf32> -> vector<2x256xf32>
    %134 = arith.addf %132, %133 : vector<2x256xf32>
    %135 = arith.negf %134 : vector<2x256xf32>
    %136 = math.exp %135 : vector<2x256xf32>
    %cst_38 = arith.constant 1.000000e+00 : f32
    %137 = vector.broadcast %cst_38 : f32 to vector<2x256xf32>
    %138 = arith.addf %137, %136 : vector<2x256xf32>
    %139 = arith.divf %137, %138 : vector<2x256xf32>
    %140 = math.tanh %134 : vector<2x256xf32>
    %141 = vector.extract_strided_slice %139 {offsets = [0, 64], sizes = [2, 64], strides = [1, 1]} : vector<2x256xf32> to vector<2x64xf32>
    %142 = arith.mulf %141, %124 : vector<2x64xf32>
    %143 = vector.extract_strided_slice %139 {offsets = [0, 0], sizes = [2, 64], strides = [1, 1]} : vector<2x256xf32> to vector<2x64xf32>
    %144 = vector.extract_strided_slice %140 {offsets = [0, 128], sizes = [2, 64], strides = [1, 1]} : vector<2x256xf32> to vector<2x64xf32>
    %145 = arith.mulf %143, %144 : vector<2x64xf32>
    %146 = arith.addf %142, %145 : vector<2x64xf32>
    %147 = vector.extract_strided_slice %139 {offsets = [0, 192], sizes = [2, 64], strides = [1, 1]} : vector<2x256xf32> to vector<2x64xf32>
    %148 = math.tanh %146 : vector<2x64xf32>
    %149 = arith.mulf %147, %148 : vector<2x64xf32>
    %150 = vector.extract_strided_slice %23 {offsets = [10, 0], sizes = [2, 1], strides = [1, 1]} : vector<16x1xf32> to vector<2x1xf32>
    %151 = vector.broadcast %150 : vector<2x1xf32> to vector<2x64xf32>
    %152 = arith.mulf %151, %149 : vector<2x64xf32>
    %153 = arith.addf %131, %152 : vector<2x64xf32>
    %154 = vector.extract_strided_slice %21 {offsets = [12, 0], sizes = [2, 256], strides = [1, 1]} : vector<16x256xf32> to vector<2x256xf32>
    %cst_39 = arith.constant dense<0.000000e+00> : vector<2x256xf32>
    %155 = tpu.matmul %149, %22, %cst_39 {dimension_numbers = #tpu.dot_dimension_numbers<[1], [0], [0], [1], [0, 0, 1, 1], [], []>} : vector<2x64xf32>, vector<64x256xf32>, vector<2x256xf32> -> vector<2x256xf32>
    %156 = arith.addf %154, %155 : vector<2x256xf32>
    %157 = arith.negf %156 : vector<2x256xf32>
    %158 = math.exp %157 : vector<2x256xf32>
    %cst_40 = arith.constant 1.000000e+00 : f32
    %159 = vector.broadcast %cst_40 : f32 to vector<2x256xf32>
    %160 = arith.addf %159, %158 : vector<2x256xf32>
    %161 = arith.divf %159, %160 : vector<2x256xf32>
    %162 = math.tanh %156 : vector<2x256xf32>
    %163 = vector.extract_strided_slice %161 {offsets = [0, 64], sizes = [2, 64], strides = [1, 1]} : vector<2x256xf32> to vector<2x64xf32>
    %164 = arith.mulf %163, %146 : vector<2x64xf32>
    %165 = vector.extract_strided_slice %161 {offsets = [0, 0], sizes = [2, 64], strides = [1, 1]} : vector<2x256xf32> to vector<2x64xf32>
    %166 = vector.extract_strided_slice %162 {offsets = [0, 128], sizes = [2, 64], strides = [1, 1]} : vector<2x256xf32> to vector<2x64xf32>
    %167 = arith.mulf %165, %166 : vector<2x64xf32>
    %168 = arith.addf %164, %167 : vector<2x64xf32>
    %169 = vector.extract_strided_slice %161 {offsets = [0, 192], sizes = [2, 64], strides = [1, 1]} : vector<2x256xf32> to vector<2x64xf32>
    %170 = math.tanh %168 : vector<2x64xf32>
    %171 = arith.mulf %169, %170 : vector<2x64xf32>
    %172 = vector.extract_strided_slice %23 {offsets = [12, 0], sizes = [2, 1], strides = [1, 1]} : vector<16x1xf32> to vector<2x1xf32>
    %173 = vector.broadcast %172 : vector<2x1xf32> to vector<2x64xf32>
    %174 = arith.mulf %173, %171 : vector<2x64xf32>
    %175 = arith.addf %153, %174 : vector<2x64xf32>
    %176 = vector.extract_strided_slice %21 {offsets = [14, 0], sizes = [2, 256], strides = [1, 1]} : vector<16x256xf32> to vector<2x256xf32>
    %cst_41 = arith.constant dense<0.000000e+00> : vector<2x256xf32>
    %177 = tpu.matmul %171, %22, %cst_41 {dimension_numbers = #tpu.dot_dimension_numbers<[1], [0], [0], [1], [0, 0, 1, 1], [], []>} : vector<2x64xf32>, vector<64x256xf32>, vector<2x256xf32> -> vector<2x256xf32>
    %178 = arith.addf %176, %177 : vector<2x256xf32>
    %179 = arith.negf %178 : vector<2x256xf32>
    %180 = math.exp %179 : vector<2x256xf32>
    %cst_42 = arith.constant 1.000000e+00 : f32
    %181 = vector.broadcast %cst_42 : f32 to vector<2x256xf32>
    %182 = arith.addf %181, %180 : vector<2x256xf32>
    %183 = arith.divf %181, %182 : vector<2x256xf32>
    %184 = math.tanh %178 : vector<2x256xf32>
    %185 = vector.extract_strided_slice %183 {offsets = [0, 64], sizes = [2, 64], strides = [1, 1]} : vector<2x256xf32> to vector<2x64xf32>
    %186 = arith.mulf %185, %168 : vector<2x64xf32>
    %187 = vector.extract_strided_slice %183 {offsets = [0, 0], sizes = [2, 64], strides = [1, 1]} : vector<2x256xf32> to vector<2x64xf32>
    %188 = vector.extract_strided_slice %184 {offsets = [0, 128], sizes = [2, 64], strides = [1, 1]} : vector<2x256xf32> to vector<2x64xf32>
    %189 = arith.mulf %187, %188 : vector<2x64xf32>
    %190 = arith.addf %186, %189 : vector<2x64xf32>
    %191 = vector.extract_strided_slice %183 {offsets = [0, 192], sizes = [2, 64], strides = [1, 1]} : vector<2x256xf32> to vector<2x64xf32>
    %192 = math.tanh %190 : vector<2x64xf32>
    %193 = arith.mulf %191, %192 : vector<2x64xf32>
    %194 = vector.extract_strided_slice %23 {offsets = [14, 0], sizes = [2, 1], strides = [1, 1]} : vector<16x1xf32> to vector<2x1xf32>
    %195 = vector.broadcast %194 : vector<2x1xf32> to vector<2x64xf32>
    %196 = arith.mulf %195, %193 : vector<2x64xf32>
    %197 = arith.addf %175, %196 : vector<2x64xf32>
    %c0_43 = arith.constant 0 : index
    %c0_44 = arith.constant 0 : index
    %198 = vector.load %arg12[%c0_43, %c0_44] : memref<2x64xf32, #tpu.memory_space<vmem>>, vector<2x64xf32>
    tpu.vector_store %arg12[%c0_43, %c0_44], %197 {strides = array<i32>} : memref<2x64xf32, #tpu.memory_space<vmem>>, vector<2x64xf32>,
    return
  }
}

</mosaic_0001>

<llo_original>
// kernel: model_forward.1
$region0: #{model_forward.1}
  #allocation0 [shape = 'u32[]', space=smem, size = 0x4, offset = 0x4, fixed_abs, tag = 'smem constant byte address 0x4 - core index']
  #allocation1 [shape = 'u32[144,128]{1,0:T(1,128)}', space=vmem, size = 0x12000, scoped, tag = 'internal scratch']
  %s0 = inlined_call_operand.vmem [shape: f32[512,32], index: 0, kind: input, shape index: {}]
  %s1 = inlined_call_operand.vmem [shape: f32[32,32], index: 1, kind: input, shape index: {}]
  %s2 = inlined_call_operand.vmem [shape: f32[1,32], index: 2, kind: input, shape index: {}]
  %s3 = inlined_call_operand.vmem [shape: f32[2,512], index: 3, kind: input, shape index: {}]
  %s4 = inlined_call_operand.vmem [shape: f32[32,128], index: 4, kind: input, shape index: {}]
  %s5 = inlined_call_operand.vmem [shape: f32[1,128], index: 5, kind: input, shape index: {}]
  %s6 = inlined_call_operand.vmem [shape: f32[16,64], index: 6, kind: input, shape index: {}]
  %s7 = inlined_call_operand.vmem [shape: f32[64,256], index: 7, kind: input, shape index: {}]
  %s8 = inlined_call_operand.vmem [shape: f32[1,256], index: 8, kind: input, shape index: {}]
  %s9 = inlined_call_operand.vmem [shape: f32[64,256], index: 9, kind: input, shape index: {}]
  %s10 = inlined_call_operand.vmem [shape: f32[16,1], index: 10, kind: input, shape index: {}]
  %s11 = inlined_call_operand.hbm [shape: f32[2,128], index: 11, kind: output, shape index: {0}]
  %s12 = inlined_call_operand.hbm [shape: f32[2,64], index: 12, kind: output, shape index: {1}]
  %13 = xla_tuple %s11, %s12
  %s14 = sld [smem:[#allocation0]]
  $region62: #{model_forward.1} parent=0
    _
  %s16 = ssub.s32 1, %s14
  %s17 = scalar_select 0, %s16, %s14
  $region1: #{model_forward.1} parent=0
    #allocation2 [shape = 'u8[1024]{0}', space=vmem, size = 0x400, scoped, tag = 'output window, operand 0, single buffered']
    #allocation3 [shape = 's32[1]{0}', space=sflag, size = 0x4, scoped, tag = 'scoped memory for model_forward.1']
    #allocation4 [shape = 'u8[1024]{0}', space=vmem, size = 0x400, scoped, tag = 'output window, operand 1, single buffered']
    #allocation5 [shape = 's32[1]{0}', space=sflag, size = 0x4, scoped, tag = 'scoped memory for model_forward.1']
    %18 = vsyncpa [#allocation3], 0
    %19 = vsyncpa [#allocation5], 0
    // Predicated region
    $region2: #{model_forward.1} parent=1 // pred_check
      _
    $region3: #{model_forward.1} parent=1 // pred_check_branch
      %21 = sbr.rel (0) target = $region5
    $region4: #{model_forward.1} parent=1 // pred_region
      _
    $region5: #{model_forward.1} parent=1 // pred_fallthru
      _
    // Predicated region
    $region6: #{model_forward.1} parent=1 // pred_check
      _
    $region7: #{model_forward.1} parent=1 // pred_check_branch
      %23 = sbr.rel (0) target = $region9
    $region8: #{model_forward.1} parent=1 // pred_region
      _
    $region9: #{model_forward.1} parent=1 // pred_fallthru
      _
    // Predicated region
    $region10: #{model_forward.1} parent=1 // pred_check
      _
    $region11: #{model_forward.1} parent=1 // pred_check_branch
      %25 = sbr.rel (0) target = $region13
    $region12: #{model_forward.1} parent=1 // pred_region
      _
    $region13: #{model_forward.1} parent=1 // pred_fallthru
      _
    // Predicated region
    $region14: #{model_forward.1} parent=1 // pred_check
      _
    $region15: #{model_forward.1} parent=1 // pred_check_branch
      %27 = sbr.rel (0) target = $region17
    $region16: #{model_forward.1} parent=1 // pred_region
      _
    $region17: #{model_forward.1} parent=1 // pred_fallthru
      _
    // Predicated region
    $region18: #{model_forward.1} parent=1 // pred_check
      _
    $region19: #{model_forward.1} parent=1 // pred_check_branch
      %29 = sbr.rel (0) target = $region21
    $region20: #{model_forward.1} parent=1 // pred_region
      _
    $region21: #{model_forward.1} parent=1 // pred_fallthru
      _
    // Predicated region
    $region22: #{model_forward.1} parent=1 // pred_check
      _
    $region23: #{model_forward.1} parent=1 // pred_check_branch
      %31 = sbr.rel (0) target = $region25
    $region24: #{model_forward.1} parent=1 // pred_region
      _
    $region25: #{model_forward.1} parent=1 // pred_fallthru
      _
    // Predicated region
    $region26: #{model_forward.1} parent=1 // pred_check
      _
    $region27: #{model_forward.1} parent=1 // pred_check_branch
      %33 = sbr.rel (0) target = $region29
    $region28: #{model_forward.1} parent=1 // pred_region
      _
    $region29: #{model_forward.1} parent=1 // pred_fallthru
      _
    // Predicated region
    $region30: #{model_forward.1} parent=1 // pred_check
      _
    $region31: #{model_forward.1} parent=1 // pred_check_branch
      %35 = sbr.rel (0) target = $region33
    $region32: #{model_forward.1} parent=1 // pred_region
      _
    $region33: #{model_forward.1} parent=1 // pred_fallthru
      _
    // Predicated region
    $region34: #{model_forward.1} parent=1 // pred_check
      _
    $region35: #{model_forward.1} parent=1 // pred_check_branch
      %37 = sbr.rel (0) target = $region37
    $region36: #{model_forward.1} parent=1 // pred_region
      _
    $region37: #{model_forward.1} parent=1 // pred_fallthru
      _
    // Predicated region
    $region38: #{model_forward.1} parent=1 // pred_check
      _
    $region39: #{model_forward.1} parent=1 // pred_check_branch
      %39 = sbr.rel (0) target = $region41
    $region40: #{model_forward.1} parent=1 // pred_region
      _
    $region41: #{model_forward.1} parent=1 // pred_fallthru
      _
    // Predicated region
    $region42: #{model_forward.1} parent=1 // pred_check
      _
    $region43: #{model_forward.1} parent=1 // pred_check_branch
      %41 = sbr.rel (0) target = $region45
    $region44: #{model_forward.1} parent=1 // pred_region
      _
    $region45: #{model_forward.1} parent=1 // pred_fallthru
      _
    %v42 = vld [vmem:[%s0] sm:$0xff]
    %v43 = vld [vmem:[%s0 + $0x8] sm:$0xff]
    %v44 = vld [vmem:[%s0 + $0x10] sm:$0xff]
    %v45 = vld [vmem:[%s0 + $0x18] sm:$0xff]
    %v46 = vld [vmem:[%s0 + $0x20] sm:$0xff]
    %v47 = vld [vmem:[%s0 + $0x28] sm:$0xff]
    %v48 = vld [vmem:[%s0 + $0x30] sm:$0xff]
    %v49 = vld [vmem:[%s0 + $0x38] sm:$0xff]
    %v50 = vld [vmem:[%s0 + $0x40] sm:$0xff]
    %v51 = vld [vmem:[%s0 + $0x48] sm:$0xff]
    %v52 = vld [vmem:[%s0 + $0x50] sm:$0xff]
    %v53 = vld [vmem:[%s0 + $0x58] sm:$0xff]
    %v54 = vld [vmem:[%s0 + $0x60] sm:$0xff]
    %v55 = vld [vmem:[%s0 + $0x68] sm:$0xff]
    %v56 = vld [vmem:[%s0 + $0x70] sm:$0xff]
    %v57 = vld [vmem:[%s0 + $0x78] sm:$0xff]
    %v58 = vld [vmem:[%s0 + $0x80] sm:$0xff]
    %v59 = vld [vmem:[%s0 + $0x88] sm:$0xff]
    %v60 = vld [vmem:[%s0 + $0x90] sm:$0xff]
    %v61 = vld [vmem:[%s0 + $0x98] sm:$0xff]
    %v62 = vld [vmem:[%s0 + $0xa0] sm:$0xff]
    %v63 = vld [vmem:[%s0 + $0xa8] sm:$0xff]
    %v64 = vld [vmem:[%s0 + $0xb0] sm:$0xff]
    %v65 = vld [vmem:[%s0 + $0xb8] sm:$0xff]
    %v66 = vld [vmem:[%s0 + $0xc0] sm:$0xff]
    %v67 = vld [vmem:[%s0 + $0xc8] sm:$0xff]
    %v68 = vld [vmem:[%s0 + $0xd0] sm:$0xff]
    %v69 = vld [vmem:[%s0 + $0xd8] sm:$0xff]
    %v70 = vld [vmem:[%s0 + $0xe0] sm:$0xff]
    %v71 = vld [vmem:[%s0 + $0xe8] sm:$0xff]
    %v72 = vld [vmem:[%s0 + $0xf0] sm:$0xff]
    %v73 = vld [vmem:[%s0 + $0xf8] sm:$0xff]
    %v74 = vld [vmem:[%s0 + $0x100] sm:$0xff]
    %v75 = vld [vmem:[%s0 + $0x108] sm:$0xff]
    %v76 = vld [vmem:[%s0 + $0x110] sm:$0xff]
    %v77 = vld [vmem:[%s0 + $0x118] sm:$0xff]
    %v78 = vld [vmem:[%s0 + $0x120] sm:$0xff]
    %v79 = vld [vmem:[%s0 + $0x128] sm:$0xff]
    %v80 = vld [vmem:[%s0 + $0x130] sm:$0xff]
    %v81 = vld [vmem:[%s0 + $0x138] sm:$0xff]
    %v82 = vld [vmem:[%s0 + $0x140] sm:$0xff]
    %v83 = vld [vmem:[%s0 + $0x148] sm:$0xff]
    %v84 = vld [vmem:[%s0 + $0x150] sm:$0xff]
    %v85 = vld [vmem:[%s0 + $0x158] sm:$0xff]
    %v86 = vld [vmem:[%s0 + $0x160] sm:$0xff]
    %v87 = vld [vmem:[%s0 + $0x168] sm:$0xff]
    %v88 = vld [vmem:[%s0 + $0x170] sm:$0xff]
    %v89 = vld [vmem:[%s0 + $0x178] sm:$0xff]
    %v90 = vld [vmem:[%s0 + $0x180] sm:$0xff]
    %v91 = vld [vmem:[%s0 + $0x188] sm:$0xff]
    %v92 = vld [vmem:[%s0 + $0x190] sm:$0xff]
    %v93 = vld [vmem:[%s0 + $0x198] sm:$0xff]
    %v94 = vld [vmem:[%s0 + $0x1a0] sm:$0xff]
    %v95 = vld [vmem:[%s0 + $0x1a8] sm:$0xff]
    %v96 = vld [vmem:[%s0 + $0x1b0] sm:$0xff]
    %v97 = vld [vmem:[%s0 + $0x1b8] sm:$0xff]
    %v98 = vld [vmem:[%s0 + $0x1c0] sm:$0xff]
    %v99 = vld [vmem:[%s0 + $0x1c8] sm:$0xff]
    %v100 = vld [vmem:[%s0 + $0x1d0] sm:$0xff]
    %v101 = vld [vmem:[%s0 + $0x1d8] sm:$0xff]
    %v102 = vld [vmem:[%s0 + $0x1e0] sm:$0xff]
    %v103 = vld [vmem:[%s0 + $0x1e8] sm:$0xff]
    %v104 = vld [vmem:[%s0 + $0x1f0] sm:$0xff]
    %v105 = vld [vmem:[%s0 + $0x1f8] sm:$0xff]
    %v106 = vld [vmem:[%s1] sm:$0xff]
    %v107 = vld [vmem:[%s1 + $0x8] sm:$0xff]
    %v108 = vld [vmem:[%s1 + $0x10] sm:$0xff]
    %v109 = vld [vmem:[%s1 + $0x18] sm:$0xff]
    %v110 = vld [vmem:[%s2] sm:$0x1]
    %v112 = vlaneseq
    %v113 = vshrl.u32 %v112, 7
    %v114 = vsub.s32 0, %v113
    %v115 = vrot.slane %v110, %v114
    %vm117 = vcmask 261120
    %v119 = vsel %vm117, %v42, 0
    %v122 = vsel %vm117, %v43, 0
    %v125 = vsel %vm117, %v44, 0
    %v128 = vsel %vm117, %v45, 0
    %v131 = vsel %vm117, %v46, 0
    %v134 = vsel %vm117, %v47, 0
    %v137 = vsel %vm117, %v48, 0
    %v140 = vsel %vm117, %v49, 0
    %v143 = vsel %vm117, %v50, 0
    %v146 = vsel %vm117, %v51, 0
    %v149 = vsel %vm117, %v52, 0
    %v152 = vsel %vm117, %v53, 0
    %v155 = vsel %vm117, %v54, 0
    %v158 = vsel %vm117, %v55, 0
    %v161 = vsel %vm117, %v56, 0
    %v164 = vsel %vm117, %v57, 0
    %v167 = vsel %vm117, %v58, 0
    %v170 = vsel %vm117, %v59, 0
    %v173 = vsel %vm117, %v60, 0
    %v176 = vsel %vm117, %v61, 0
    %v179 = vsel %vm117, %v62, 0
    %v182 = vsel %vm117, %v63, 0
    %v185 = vsel %vm117, %v64, 0
    %v188 = vsel %vm117, %v65, 0
    %v191 = vsel %vm117, %v66, 0
    %v194 = vsel %vm117, %v67, 0
    %v197 = vsel %vm117, %v68, 0
    %v200 = vsel %vm117, %v69, 0
    %v203 = vsel %vm117, %v70, 0
    %v206 = vsel %vm117, %v71, 0
    %v209 = vsel %vm117, %v72, 0
    %v212 = vsel %vm117, %v73, 0
    %v215 = vsel %vm117, %v74, 0
    %v218 = vsel %vm117, %v75, 0
    %v221 = vsel %vm117, %v76, 0
    %v224 = vsel %vm117, %v77, 0
    %v227 = vsel %vm117, %v78, 0
    %v230 = vsel %vm117, %v79, 0
    %v233 = vsel %vm117, %v80, 0
    %v236 = vsel %vm117, %v81, 0
    %v239 = vsel %vm117, %v82, 0
    %v242 = vsel %vm117, %v83, 0
    %v245 = vsel %vm117, %v84, 0
    %v248 = vsel %vm117, %v85, 0
    %v251 = vsel %vm117, %v86, 0
    %v254 = vsel %vm117, %v87, 0
    %v257 = vsel %vm117, %v88, 0
    %v260 = vsel %vm117, %v89, 0
    %v263 = vsel %vm117, %v90, 0
    %v266 = vsel %vm117, %v91, 0
    %v269 = vsel %vm117, %v92, 0
    %v272 = vsel %vm117, %v93, 0
    %v275 = vsel %vm117, %v94, 0
    %v278 = vsel %vm117, %v95, 0
    %v281 = vsel %vm117, %v96, 0
    %v284 = vsel %vm117, %v97, 0
    %v287 = vsel %vm117, %v98, 0
    %v290 = vsel %vm117, %v99, 0
    %v293 = vsel %vm117, %v100, 0
    %v296 = vsel %vm117, %v101, 0
    %v299 = vsel %vm117, %v102, 0
    %v302 = vsel %vm117, %v103, 0
    %v305 = vsel %vm117, %v104, 0
    %v308 = vsel %vm117, %v105, 0
    %310 = vmatprep.subr.mxu0 0.0
    %311 = vmatpush1.msra.mxu0 %v106
    %312 = vmatprep.subr.mxu0 0.0
    %313 = vmatpush1.msra.mxu0 %v107
    %314 = vmatprep.subr.mxu0 0.0
    %315 = vmatpush1.msra.mxu0 %v108
    %316 = vmatprep.subr.mxu0 0.0
    %317 = vmatpush1.msra.mxu0 %v109
    %318 = vmatprep.subr.mxu0 0.0
    %319 = vmatpush1.msra.mxu0 0.0
    %320 = vmatprep.subr.mxu0 0.0
    %321 = vmatpush1.msra.mxu0 0.0
    %322 = vmatprep.subr.mxu0 0.0
    %323 = vmatpush1.msra.mxu0 0.0
    %324 = vmatprep.subr.mxu0 0.0
    %325 = vmatpush1.msra.mxu0 0.0
    %326 = vmatprep.subr.mxu0 0.0
    %327 = vmatpush1.msra.mxu0 0.0
    %328 = vmatprep.subr.mxu0 0.0
    %329 = vmatpush1.msra.mxu0 0.0
    %330 = vmatprep.subr.mxu0 0.0
    %331 = vmatpush1.msra.mxu0 0.0
    %332 = vmatprep.subr.mxu0 0.0
    %333 = vmatpush1.msra.mxu0 0.0
    %334 = vmatprep.subr.mxu0 0.0
    %335 = vmatpush1.msra.mxu0 0.0
    %336 = vmatprep.subr.mxu0 0.0
    %337 = vmatpush1.msra.mxu0 0.0
    %338 = vmatprep.subr.mxu0 0.0
    %339 = vmatpush1.msra.mxu0 0.0
    %340 = vmatprep.subr.mxu0 0.0
    %341 = vmatpush1.msra.mxu0 0.0
    %342 = vmatprep.subr.mxu0 0.0
    %343 = vmatpush1.msra.mxu0 0.0
    %344 = vmatprep.subr.mxu0 0.0
    %345 = vmatpush1.msra.mxu0 0.0
    %346 = vmatprep.subr.mxu0 0.0
    %347 = vmatpush1.msra.mxu0 0.0
    %348 = vmatprep.subr.mxu0 0.0
    %349 = vmatpush1.msra.mxu0 0.0
    %350 = vmatprep.subr.mxu0 0.0
    %351 = vmatpush1.msra.mxu0 0.0
    %352 = vmatprep.subr.mxu0 0.0
    %353 = vmatpush1.msra.mxu0 0.0
    %354 = vmatprep.subr.mxu0 0.0
    %355 = vmatpush1.msra.mxu0 0.0
    %356 = vmatprep.subr.mxu0 0.0
    %357 = vmatpush1.msra.mxu0 0.0
    %358 = vmatprep.subr.mxu0 0.0
    %359 = vmatpush1.msra.mxu0 0.0
    %360 = vmatprep.subr.mxu0 0.0
    %361 = vmatpush1.msra.mxu0 0.0
    %362 = vmatprep.subr.mxu0 0.0
    %363 = vmatpush1.msra.mxu0 0.0
    %364 = vmatprep.subr.mxu0 0.0
    %365 = vmatpush1.msra.mxu0 0.0
    %366 = vmatprep.subr.mxu0 0.0
    %367 = vmatpush1.msra.mxu0 0.0
    %368 = vmatprep.subr.mxu0 0.0
    %369 = vmatpush1.msra.mxu0 0.0
    %370 = vmatprep.subr.mxu0 0.0
    %371 = vmatpush1.msra.mxu0 0.0
    %372 = vmatprep.subr.mxu0 0.0
    %373 = vmatpush1.msra.mxu0 0.0
    %374 = vmatprep.mubr.f32.mxu0 0.0
    %375 = vmatmul.mubr.f32.gmra.mrb[0].mxu0 %v119
    %v376 = vpop.f32.mrb[0].mxu0
    %v377 = vadd.f32 %v115, %v376
    %v378 = vpop.f32.mrb[0].mxu0
    %379 = vmatprep.mubr.f32.mxu0 0.0
    %380 = vmatmul.mubr.f32.gmra.mrb[0].mxu0 %v122
    %v381 = vpop.f32.mrb[0].mxu0
    %v382 = vadd.f32 %v115, %v381
    %v383 = vpop.f32.mrb[0].mxu0
    %384 = vmatprep.mubr.f32.mxu0 0.0
    %385 = vmatmul.mubr.f32.gmra.mrb[0].mxu0 %v125
    %v386 = vpop.f32.mrb[0].mxu0
    %v387 = vadd.f32 %v115, %v386
    %v388 = vpop.f32.mrb[0].mxu0
    %389 = vmatprep.mubr.f32.mxu0 0.0
    %390 = vmatmul.mubr.f32.gmra.mrb[0].mxu0 %v128
    %v391 = vpop.f32.mrb[0].mxu0
    %v392 = vadd.f32 %v115, %v391
    %v393 = vpop.f32.mrb[0].mxu0
    %394 = vmatprep.mubr.f32.mxu0 0.0
    %395 = vmatmul.mubr.f32.gmra.mrb[0].mxu0 %v131
    %v396 = vpop.f32.mrb[0].mxu0
    %v397 = vadd.f32 %v115, %v396
    %v398 = vpop.f32.mrb[0].mxu0
    %399 = vmatprep.mubr.f32.mxu0 0.0
    %400 = vmatmul.mubr.f32.gmra.mrb[0].mxu0 %v134
    %v401 = vpop.f32.mrb[0].mxu0
    %v402 = vadd.f32 %v115, %v401
    %v403 = vpop.f32.mrb[0].mxu0
    %404 = vmatprep.mubr.f32.mxu0 0.0
    %405 = vmatmul.mubr.f32.gmra.mrb[0].mxu0 %v137
    %v406 = vpop.f32.mrb[0].mxu0
    %v407 = vadd.f32 %v115, %v406
    %v408 = vpop.f32.mrb[0].mxu0
    %409 = vmatprep.mubr.f32.mxu0 0.0
    %410 = vmatmul.mubr.f32.gmra.mrb[0].mxu0 %v140
    %v411 = vpop.f32.mrb[0].mxu0
    %v412 = vadd.f32 %v115, %v411
    %v413 = vpop.f32.mrb[0].mxu0
    %414 = vmatprep.mubr.f32.mxu0 0.0
    %415 = vmatmul.mubr.f32.gmra.mrb[0].mxu0 %v143
    %v416 = vpop.f32.mrb[0].mxu0
    %v417 = vadd.f32 %v115, %v416
    %v418 = vpop.f32.mrb[0].mxu0
    %419 = vmatprep.mubr.f32.mxu0 0.0
    %420 = vmatmul.mubr.f32.gmra.mrb[0].mxu0 %v146
    %v421 = vpop.f32.mrb[0].mxu0
    %v422 = vadd.f32 %v115, %v421
    %v423 = vpop.f32.mrb[0].mxu0
    %424 = vmatprep.mubr.f32.mxu0 0.0
    %425 = vmatmul.mubr.f32.gmra.mrb[0].mxu0 %v149
    %v426 = vpop.f32.mrb[0].mxu0
    %v427 = vadd.f32 %v115, %v426
    %v428 = vpop.f32.mrb[0].mxu0
    %429 = vmatprep.mubr.f32.mxu0 0.0
    %430 = vmatmul.mubr.f32.gmra.mrb[0].mxu0 %v152
    %v431 = vpop.f32.mrb[0].mxu0
    %v432 = vadd.f32 %v115, %v431
    %v433 = vpop.f32.mrb[0].mxu0
    %434 = vmatprep.mubr.f32.mxu0 0.0
    %435 = vmatmul.mubr.f32.gmra.mrb[0].mxu0 %v155
    %v436 = vpop.f32.mrb[0].mxu0
    %v437 = vadd.f32 %v115, %v436
    %v438 = vpop.f32.mrb[0].mxu0
    %439 = vmatprep.mubr.f32.mxu0 0.0
    %440 = vmatmul.mubr.f32.gmra.mrb[0].mxu0 %v158
    %v441 = vpop.f32.mrb[0].mxu0
    %v442 = vadd.f32 %v115, %v441
    %v443 = vpop.f32.mrb[0].mxu0
    %444 = vmatprep.mubr.f32.mxu0 0.0
    %445 = vmatmul.mubr.f32.gmra.mrb[0].mxu0 %v161
    %v446 = vpop.f32.mrb[0].mxu0
    %v447 = vadd.f32 %v115, %v446
    %v448 = vpop.f32.mrb[0].mxu0
    %449 = vmatprep.mubr.f32.mxu0 0.0
    %450 = vmatmul.mubr.f32.gmra.mrb[0].mxu0 %v164
    %v451 = vpop.f32.mrb[0].mxu0
    %v452 = vadd.f32 %v115, %v451
    %v453 = vpop.f32.mrb[0].mxu0
    %454 = vmatprep.mubr.f32.mxu0 0.0
    %455 = vmatmul.mubr.f32.gmra.mrb[0].mxu0 %v167
    %v456 = vpop.f32.mrb[0].mxu0
    %v457 = vadd.f32 %v115, %v456
    %v458 = vpop.f32.mrb[0].mxu0
    %459 = vmatprep.mubr.f32.mxu0 0.0
    %460 = vmatmul.mubr.f32.gmra.mrb[0].mxu0 %v170
    %v461 = vpop.f32.mrb[0].mxu0
    %v462 = vadd.f32 %v115, %v461
    %v463 = vpop.f32.mrb[0].mxu0
    %464 = vmatprep.mubr.f32.mxu0 0.0
    %465 = vmatmul.mubr.f32.gmra.mrb[0].mxu0 %v173
    %v466 = vpop.f32.mrb[0].mxu0
    %v467 = vadd.f32 %v115, %v466
    %v468 = vpop.f32.mrb[0].mxu0
    %469 = vmatprep.mubr.f32.mxu0 0.0
    %470 = vmatmul.mubr.f32.gmra.mrb[0].mxu0 %v176
    %v471 = vpop.f32.mrb[0].mxu0
    %v472 = vadd.f32 %v115, %v471
    %v473 = vpop.f32.mrb[0].mxu0
    %474 = vmatprep.mubr.f32.mxu0 0.0
    %475 = vmatmul.mubr.f32.gmra.mrb[0].mxu0 %v179
    %v476 = vpop.f32.mrb[0].mxu0
    %v477 = vadd.f32 %v115, %v476
    %v478 = vpop.f32.mrb[0].mxu0
    %479 = vmatprep.mubr.f32.mxu0 0.0
    %480 = vmatmul.mubr.f32.gmra.mrb[0].mxu0 %v182
    %v481 = vpop.f32.mrb[0].mxu0
    %v482 = vadd.f32 %v115, %v481
    %v483 = vpop.f32.mrb[0].mxu0
    %484 = vmatprep.mubr.f32.mxu0 0.0
    %485 = vmatmul.mubr.f32.gmra.mrb[0].mxu0 %v185
    %v486 = vpop.f32.mrb[0].mxu0
    %v487 = vadd.f32 %v115, %v486
    %v488 = vpop.f32.mrb[0].mxu0
    %489 = vmatprep.mubr.f32.mxu0 0.0
    %490 = vmatmul.mubr.f32.gmra.mrb[0].mxu0 %v188
    %v491 = vpop.f32.mrb[0].mxu0
    %v492 = vadd.f32 %v115, %v491
    %v493 = vpop.f32.mrb[0].mxu0
    %494 = vmatprep.mubr.f32.mxu0 0.0
    %495 = vmatmul.mubr.f32.gmra.mrb[0].mxu0 %v191
    %v496 = vpop.f32.mrb[0].mxu0
    %v497 = vadd.f32 %v115, %v496
    %v498 = vpop.f32.mrb[0].mxu0
    %499 = vmatprep.mubr.f32.mxu0 0.0
    %500 = vmatmul.mubr.f32.gmra.mrb[0].mxu0 %v194
    %v501 = vpop.f32.mrb[0].mxu0
    %v502 = vadd.f32 %v115, %v501
    %v503 = vpop.f32.mrb[0].mxu0
    %504 = vmatprep.mubr.f32.mxu0 0.0
    %505 = vmatmul.mubr.f32.gmra.mrb[0].mxu0 %v197
    %v506 = vpop.f32.mrb[0].mxu0
    %v507 = vadd.f32 %v115, %v506
    %v508 = vpop.f32.mrb[0].mxu0
    %509 = vmatprep.mubr.f32.mxu0 0.0
    %510 = vmatmul.mubr.f32.gmra.mrb[0].mxu0 %v200
    %v511 = vpop.f32.mrb[0].mxu0
    %v512 = vadd.f32 %v115, %v511
    %v513 = vpop.f32.mrb[0].mxu0
    %514 = vmatprep.mubr.f32.mxu0 0.0
    %515 = vmatmul.mubr.f32.gmra.mrb[0].mxu0 %v203
    %v516 = vpop.f32.mrb[0].mxu0
    %v517 = vadd.f32 %v115, %v516
    %v518 = vpop.f32.mrb[0].mxu0
    %519 = vmatprep.mubr.f32.mxu0 0.0
    %520 = vmatmul.mubr.f32.gmra.mrb[0].mxu0 %v206
    %v521 = vpop.f32.mrb[0].mxu0
    %v522 = vadd.f32 %v115, %v521
    %v523 = vpop.f32.mrb[0].mxu0
    %524 = vmatprep.mubr.f32.mxu0 0.0
    %525 = vmatmul.mubr.f32.gmra.mrb[0].mxu0 %v209
    %v526 = vpop.f32.mrb[0].mxu0
    %v527 = vadd.f32 %v115, %v526
    %v528 = vpop.f32.mrb[0].mxu0
    %529 = vmatprep.mubr.f32.mxu0 0.0
    %530 = vmatmul.mubr.f32.gmra.mrb[0].mxu0 %v212
    %v531 = vpop.f32.mrb[0].mxu0
    %v532 = vadd.f32 %v115, %v531
    %v533 = vpop.f32.mrb[0].mxu0
    %534 = vmatprep.mubr.f32.mxu0 0.0
    %535 = vmatmul.mubr.f32.gmra.mrb[0].mxu0 %v215
    %v536 = vpop.f32.mrb[0].mxu0
    %v537 = vadd.f32 %v115, %v536
    %v538 = vpop.f32.mrb[0].mxu0
    %539 = vmatprep.mubr.f32.mxu0 0.0
    %540 = vmatmul.mubr.f32.gmra.mrb[0].mxu0 %v218
    %v541 = vpop.f32.mrb[0].mxu0
    %v542 = vadd.f32 %v115, %v541
    %v543 = vpop.f32.mrb[0].mxu0
    %544 = vmatprep.mubr.f32.mxu0 0.0
    %545 = vmatmul.mubr.f32.gmra.mrb[0].mxu0 %v221
    %v546 = vpop.f32.mrb[0].mxu0
    %v547 = vadd.f32 %v115, %v546
    %v548 = vpop.f32.mrb[0].mxu0
    %549 = vmatprep.mubr.f32.mxu0 0.0
    %550 = vmatmul.mubr.f32.gmra.mrb[0].mxu0 %v224
    %v551 = vpop.f32.mrb[0].mxu0
    %v552 = vadd.f32 %v115, %v551
    %v553 = vpop.f32.mrb[0].mxu0
    %554 = vmatprep.mubr.f32.mxu0 0.0
    %555 = vmatmul.mubr.f32.gmra.mrb[0].mxu0 %v227
    %v556 = vpop.f32.mrb[0].mxu0
    %v557 = vadd.f32 %v115, %v556
    %v558 = vpop.f32.mrb[0].mxu0
    %559 = vmatprep.mubr.f32.mxu0 0.0
    %560 = vmatmul.mubr.f32.gmra.mrb[0].mxu0 %v230
    %v561 = vpop.f32.mrb[0].mxu0
    %v562 = vadd.f32 %v115, %v561
    %v563 = vpop.f32.mrb[0].mxu0
    %564 = vmatprep.mubr.f32.mxu0 0.0
    %565 = vmatmul.mubr.f32.gmra.mrb[0].mxu0 %v233
    %v566 = vpop.f32.mrb[0].mxu0
    %v567 = vadd.f32 %v115, %v566
    %v568 = vpop.f32.mrb[0].mxu0
    %569 = vmatprep.mubr.f32.mxu0 0.0
    %570 = vmatmul.mubr.f32.gmra.mrb[0].mxu0 %v236
    %v571 = vpop.f32.mrb[0].mxu0
    %v572 = vadd.f32 %v115, %v571
    %v573 = vpop.f32.mrb[0].mxu0
    %574 = vmatprep.mubr.f32.mxu0 0.0
    %575 = vmatmul.mubr.f32.gmra.mrb[0].mxu0 %v239
    %v576 = vpop.f32.mrb[0].mxu0
    %v577 = vadd.f32 %v115, %v576
    %v578 = vpop.f32.mrb[0].mxu0
    %579 = vmatprep.mubr.f32.mxu0 0.0
    %580 = vmatmul.mubr.f32.gmra.mrb[0].mxu0 %v242
    %v581 = vpop.f32.mrb[0].mxu0
    %v582 = vadd.f32 %v115, %v581
    %v583 = vpop.f32.mrb[0].mxu0
    %584 = vmatprep.mubr.f32.mxu0 0.0
    %585 = vmatmul.mubr.f32.gmra.mrb[0].mxu0 %v245
    %v586 = vpop.f32.mrb[0].mxu0
    %v587 = vadd.f32 %v115, %v586
    %v588 = vpop.f32.mrb[0].mxu0
    %589 = vmatprep.mubr.f32.mxu0 0.0
    %590 = vmatmul.mubr.f32.gmra.mrb[0].mxu0 %v248
    %v591 = vpop.f32.mrb[0].mxu0
    %v592 = vadd.f32 %v115, %v591
    %v593 = vpop.f32.mrb[0].mxu0
    %594 = vmatprep.mubr.f32.mxu0 0.0
    %595 = vmatmul.mubr.f32.gmra.mrb[0].mxu0 %v251
    %v596 = vpop.f32.mrb[0].mxu0
    %v597 = vadd.f32 %v115, %v596
    %v598 = vpop.f32.mrb[0].mxu0
    %599 = vmatprep.mubr.f32.mxu0 0.0
    %600 = vmatmul.mubr.f32.gmra.mrb[0].mxu0 %v254
    %v601 = vpop.f32.mrb[0].mxu0
    %v602 = vadd.f32 %v115, %v601
    %v603 = vpop.f32.mrb[0].mxu0
    %604 = vmatprep.mubr.f32.mxu0 0.0
    %605 = vmatmul.mubr.f32.gmra.mrb[0].mxu0 %v257
    %v606 = vpop.f32.mrb[0].mxu0
    %v607 = vadd.f32 %v115, %v606
    %v608 = vpop.f32.mrb[0].mxu0
    %609 = vmatprep.mubr.f32.mxu0 0.0
    %610 = vmatmul.mubr.f32.gmra.mrb[0].mxu0 %v260
    %v611 = vpop.f32.mrb[0].mxu0
    %v612 = vadd.f32 %v115, %v611
    %v613 = vpop.f32.mrb[0].mxu0
    %614 = vmatprep.mubr.f32.mxu0 0.0
    %615 = vmatmul.mubr.f32.gmra.mrb[0].mxu0 %v263
    %v616 = vpop.f32.mrb[0].mxu0
    %v617 = vadd.f32 %v115, %v616
    %v618 = vpop.f32.mrb[0].mxu0
    %619 = vmatprep.mubr.f32.mxu0 0.0
    %620 = vmatmul.mubr.f32.gmra.mrb[0].mxu0 %v266
    %v621 = vpop.f32.mrb[0].mxu0
    %v622 = vadd.f32 %v115, %v621
    %v623 = vpop.f32.mrb[0].mxu0
    %624 = vmatprep.mubr.f32.mxu0 0.0
    %625 = vmatmul.mubr.f32.gmra.mrb[0].mxu0 %v269
    %v626 = vpop.f32.mrb[0].mxu0
    %v627 = vadd.f32 %v115, %v626
    %v628 = vpop.f32.mrb[0].mxu0
    %629 = vmatprep.mubr.f32.mxu0 0.0
    %630 = vmatmul.mubr.f32.gmra.mrb[0].mxu0 %v272
    %v631 = vpop.f32.mrb[0].mxu0
    %v632 = vadd.f32 %v115, %v631
    %v633 = vpop.f32.mrb[0].mxu0
    %634 = vmatprep.mubr.f32.mxu0 0.0
    %635 = vmatmul.mubr.f32.gmra.mrb[0].mxu0 %v275
    %v636 = vpop.f32.mrb[0].mxu0
    %v637 = vadd.f32 %v115, %v636
    %v638 = vpop.f32.mrb[0].mxu0
    %639 = vmatprep.mubr.f32.mxu0 0.0
    %640 = vmatmul.mubr.f32.gmra.mrb[0].mxu0 %v278
    %v641 = vpop.f32.mrb[0].mxu0
    %v642 = vadd.f32 %v115, %v641
    %v643 = vpop.f32.mrb[0].mxu0
    %644 = vmatprep.mubr.f32.mxu0 0.0
    %645 = vmatmul.mubr.f32.gmra.mrb[0].mxu0 %v281
    %v646 = vpop.f32.mrb[0].mxu0
    %v647 = vadd.f32 %v115, %v646
    %v648 = vpop.f32.mrb[0].mxu0
    %649 = vmatprep.mubr.f32.mxu0 0.0
    %650 = vmatmul.mubr.f32.gmra.mrb[0].mxu0 %v284
    %v651 = vpop.f32.mrb[0].mxu0
    %v652 = vadd.f32 %v115, %v651
    %v653 = vpop.f32.mrb[0].mxu0
    %654 = vmatprep.mubr.f32.mxu0 0.0
    %655 = vmatmul.mubr.f32.gmra.mrb[0].mxu0 %v287
    %v656 = vpop.f32.mrb[0].mxu0
    %v657 = vadd.f32 %v115, %v656
    %v658 = vpop.f32.mrb[0].mxu0
    %659 = vmatprep.mubr.f32.mxu0 0.0
    %660 = vmatmul.mubr.f32.gmra.mrb[0].mxu0 %v290
    %v661 = vpop.f32.mrb[0].mxu0
    %v662 = vadd.f32 %v115, %v661
    %v663 = vpop.f32.mrb[0].mxu0
    %664 = vmatprep.mubr.f32.mxu0 0.0
    %665 = vmatmul.mubr.f32.gmra.mrb[0].mxu0 %v293
    %v666 = vpop.f32.mrb[0].mxu0
    %v667 = vadd.f32 %v115, %v666
    %v668 = vpop.f32.mrb[0].mxu0
    %669 = vmatprep.mubr.f32.mxu0 0.0
    %670 = vmatmul.mubr.f32.gmra.mrb[0].mxu0 %v296
    %v671 = vpop.f32.mrb[0].mxu0
    %v672 = vadd.f32 %v115, %v671
    %v673 = vpop.f32.mrb[0].mxu0
    %674 = vmatprep.mubr.f32.mxu0 0.0
    %675 = vmatmul.mubr.f32.gmra.mrb[0].mxu0 %v299
    %v676 = vpop.f32.mrb[0].mxu0
    %v677 = vadd.f32 %v115, %v676
    %v678 = vpop.f32.mrb[0].mxu0
    %679 = vmatprep.mubr.f32.mxu0 0.0
    %680 = vmatmul.mubr.f32.gmra.mrb[0].mxu0 %v302
    %v681 = vpop.f32.mrb[0].mxu0
    %v682 = vadd.f32 %v115, %v681
    %v683 = vpop.f32.mrb[0].mxu0
    %684 = vmatprep.mubr.f32.mxu0 0.0
    %685 = vmatmul.mubr.f32.gmra.mrb[0].mxu0 %v305
    %v686 = vpop.f32.mrb[0].mxu0
    %v687 = vadd.f32 %v115, %v686
    %v688 = vpop.f32.mrb[0].mxu0
    %689 = vmatprep.mubr.f32.mxu0 0.0
    %690 = vmatmul.mubr.f32.gmra.mrb[0].mxu0 %v308
    %v691 = vpop.f32.mrb[0].mxu0
    %v692 = vadd.f32 %v115, %v691
    %v693 = vpop.f32.mrb[0].mxu0
    %694 = vdwg.mxu0
    %v695 = vmax.f32 %v377, 0.0
    %v696 = vmax.f32 %v382, 0.0
    %v697 = vmax.f32 %v387, 0.0
    %v698 = vmax.f32 %v392, 0.0
    %v699 = vmax.f32 %v397, 0.0
    %v700 = vmax.f32 %v402, 0.0
    %v701 = vmax.f32 %v407, 0.0
    %v702 = vmax.f32 %v412, 0.0
    %v703 = vmax.f32 %v417, 0.0
    %v704 = vmax.f32 %v422, 0.0
    %v705 = vmax.f32 %v427, 0.0
    %v706 = vmax.f32 %v432, 0.0
    %v707 = vmax.f32 %v437, 0.0
    %v708 = vmax.f32 %v442, 0.0
    %v709 = vmax.f32 %v447, 0.0
    %v710 = vmax.f32 %v452, 0.0
    %v711 = vmax.f32 %v457, 0.0
    %v712 = vmax.f32 %v462, 0.0
    %v713 = vmax.f32 %v467, 0.0
    %v714 = vmax.f32 %v472, 0.0
    %v715 = vmax.f32 %v477, 0.0
    %v716 = vmax.f32 %v482, 0.0
    %v717 = vmax.f32 %v487, 0.0
    %v718 = vmax.f32 %v492, 0.0
    %v719 = vmax.f32 %v497, 0.0
    %v720 = vmax.f32 %v502, 0.0
    %v721 = vmax.f32 %v507, 0.0
    %v722 = vmax.f32 %v512, 0.0
    %v723 = vmax.f32 %v517, 0.0
    %v724 = vmax.f32 %v522, 0.0
    %v725 = vmax.f32 %v527, 0.0
    %v726 = vmax.f32 %v532, 0.0
    %v727 = vmax.f32 %v537, 0.0
    %v728 = vmax.f32 %v542, 0.0
    %v729 = vmax.f32 %v547, 0.0
    %v730 = vmax.f32 %v552, 0.0
    %v731 = vmax.f32 %v557, 0.0
    %v732 = vmax.f32 %v562, 0.0
    %v733 = vmax.f32 %v567, 0.0
    %v734 = vmax.f32 %v572, 0.0
    %v735 = vmax.f32 %v577, 0.0
    %v736 = vmax.f32 %v582, 0.0
    %v737 = vmax.f32 %v587, 0.0
    %v738 = vmax.f32 %v592, 0.0
    %v739 = vmax.f32 %v597, 0.0
    %v740 = vmax.f32 %v602, 0.0
    %v741 = vmax.f32 %v607, 0.0
    %v742 = vmax.f32 %v612, 0.0
    %v743 = vmax.f32 %v617, 0.0
    %v744 = vmax.f32 %v622, 0.0
    %v745 = vmax.f32 %v627, 0.0
    %v746 = vmax.f32 %v632, 0.0
    %v747 = vmax.f32 %v637, 0.0
    %v748 = vmax.f32 %v642, 0.0
    %v749 = vmax.f32 %v647, 0.0
    %v750 = vmax.f32 %v652, 0.0
    %v751 = vmax.f32 %v657, 0.0
    %v752 = vmax.f32 %v662, 0.0
    %v753 = vmax.f32 %v667, 0.0
    %v754 = vmax.f32 %v672, 0.0
    %v755 = vmax.f32 %v677, 0.0
    %v756 = vmax.f32 %v682, 0.0
    %v757 = vmax.f32 %v687, 0.0
    %v758 = vmax.f32 %v692, 0.0
    %v759 = vld [vmem:[%s3] sm:$0xff]
    %v761 = vcombine.high %v759, %v759
    %v763 = vunpack.c.l.s4 1983009808
    %v764 = vunpack.c.0.s8 %v763
    %v765 = vlaneseq
    %v766 = vshrl.u32 %v765, 7
    %v767 = vsub.s32 %v764, %v766
    %v768 = vrot.slane %v759, %v767
    %v770 = vunpack.c.l.s4 1983009808
    %v771 = vunpack.c.0.s8 %v770
    %v772 = vlaneseq
    %v773 = vshrl.u32 %v772, 7
    %v774 = vsub.s32 %v771, %v773
    %v775 = vrot.slane %v761, %v774
    %v776 = vcombine.high %v768, %v768
    %v777 = vcombine.high %v775, %v775
    %782 = vmatprep.subr.mxu0 0.0
    %783 = vmatpush1.msra.mxu0 %v695
    %784 = vmatprep.subr.mxu0 0.0
    %785 = vmatpush1.msra.mxu0 %v696
    %786 = vmatprep.subr.mxu0 0.0
    %787 = vmatpush1.msra.mxu0 %v697
    %788 = vmatprep.subr.mxu0 0.0
    %789 = vmatpush1.msra.mxu0 %v698
    %790 = vmatprep.subr.mxu0 0.0
    %791 = vmatpush1.msra.mxu0 %v699
    %792 = vmatprep.subr.mxu0 0.0
    %793 = vmatpush1.msra.mxu0 %v700
    %794 = vmatprep.subr.mxu0 0.0
    %795 = vmatpush1.msra.mxu0 %v701
    %796 = vmatprep.subr.mxu0 0.0
    %797 = vmatpush1.msra.mxu0 %v702
    %798 = vmatprep.subr.mxu0 0.0
    %799 = vmatpush1.msra.mxu0 %v703
    %800 = vmatprep.subr.mxu0 0.0
    %801 = vmatpush1.msra.mxu0 %v704
    %802 = vmatprep.subr.mxu0 0.0
    %803 = vmatpush1.msra.mxu0 %v705
    %804 = vmatprep.subr.mxu0 0.0
    %805 = vmatpush1.msra.mxu0 %v706
    %806 = vmatprep.subr.mxu0 0.0
    %807 = vmatpush1.msra.mxu0 %v707
    %808 = vmatprep.subr.mxu0 0.0
    %809 = vmatpush1.msra.mxu0 %v708
    %810 = vmatprep.subr.mxu0 0.0
    %811 = vmatpush1.msra.mxu0 %v709
    %812 = vmatprep.subr.mxu0 0.0
    %813 = vmatpush1.msra.mxu0 %v710
    %814 = vmatprep.subr.mxu0 0.0
    %815 = vmatpush1.msra.mxu0 %v711
    %816 = vmatprep.subr.mxu0 0.0
    %817 = vmatpush1.msra.mxu0 %v712
    %818 = vmatprep.subr.mxu0 0.0
    %819 = vmatpush1.msra.mxu0 %v713
    %820 = vmatprep.subr.mxu0 0.0
    %821 = vmatpush1.msra.mxu0 %v714
    %822 = vmatprep.subr.mxu0 0.0
    %823 = vmatpush1.msra.mxu0 %v715
    %824 = vmatprep.subr.mxu0 0.0
    %825 = vmatpush1.msra.mxu0 %v716
    %826 = vmatprep.subr.mxu0 0.0
    %827 = vmatpush1.msra.mxu0 %v717
    %828 = vmatprep.subr.mxu0 0.0
    %829 = vmatpush1.msra.mxu0 %v718
    %830 = vmatprep.subr.mxu0 0.0
    %831 = vmatpush1.msra.mxu0 %v719
    %832 = vmatprep.subr.mxu0 0.0
    %833 = vmatpush1.msra.mxu0 %v720
    %834 = vmatprep.subr.mxu0 0.0
    %835 = vmatpush1.msra.mxu0 %v721
    %836 = vmatprep.subr.mxu0 0.0
    %837 = vmatpush1.msra.mxu0 %v722
    %838 = vmatprep.subr.mxu0 0.0
    %839 = vmatpush1.msra.mxu0 %v723
    %840 = vmatprep.subr.mxu0 0.0
    %841 = vmatpush1.msra.mxu0 %v724
    %842 = vmatprep.subr.mxu0 0.0
    %843 = vmatpush1.msra.mxu0 %v725
    %844 = vmatprep.subr.mxu0 0.0
    %845 = vmatpush1.msra.mxu0 %v726
    %846 = vmatprep.mubr.f32.mxu0 %v776
    %847 = vmatmul.mubr.f32.gmra.mrb[0].mxu0 %v768
    %v848 = vpop.f32.mrb[0].mxu0
    %v849 = vadd.f32 0.0, %v848
    %v850 = vpop.f32.mrb[0].mxu0
    %851 = vdwg.mxu0
    %852 = vmatprep.subr.mxu0 0.0
    %853 = vmatpush1.msra.mxu0 %v727
    %854 = vmatprep.subr.mxu0 0.0
    %855 = vmatpush1.msra.mxu0 %v728
    %856 = vmatprep.subr.mxu0 0.0
    %857 = vmatpush1.msra.mxu0 %v729
    %858 = vmatprep.subr.mxu0 0.0
    %859 = vmatpush1.msra.mxu0 %v730
    %860 = vmatprep.subr.mxu0 0.0
    %861 = vmatpush1.msra.mxu0 %v731
    %862 = vmatprep.subr.mxu0 0.0
    %863 = vmatpush1.msra.mxu0 %v732
    %864 = vmatprep.subr.mxu0 0.0
    %865 = vmatpush1.msra.mxu0 %v733
    %866 = vmatprep.subr.mxu0 0.0
    %867 = vmatpush1.msra.mxu0 %v734
    %868 = vmatprep.subr.mxu0 0.0
    %869 = vmatpush1.msra.mxu0 %v735
    %870 = vmatprep.subr.mxu0 0.0
    %871 = vmatpush1.msra.mxu0 %v736
    %872 = vmatprep.subr.mxu0 0.0
    %873 = vmatpush1.msra.mxu0 %v737
    %874 = vmatprep.subr.mxu0 0.0
    %875 = vmatpush1.msra.mxu0 %v738
    %876 = vmatprep.subr.mxu0 0.0
    %877 = vmatpush1.msra.mxu0 %v739
    %878 = vmatprep.subr.mxu0 0.0
    %879 = vmatpush1.msra.mxu0 %v740
    %880 = vmatprep.subr.mxu0 0.0
    %881 = vmatpush1.msra.mxu0 %v741
    %882 = vmatprep.subr.mxu0 0.0
    %883 = vmatpush1.msra.mxu0 %v742
    %884 = vmatprep.subr.mxu0 0.0
    %885 = vmatpush1.msra.mxu0 %v743
    %886 = vmatprep.subr.mxu0 0.0
    %887 = vmatpush1.msra.mxu0 %v744
    %888 = vmatprep.subr.mxu0 0.0
    %889 = vmatpush1.msra.mxu0 %v745
    %890 = vmatprep.subr.mxu0 0.0
    %891 = vmatpush1.msra.mxu0 %v746
    %892 = vmatprep.subr.mxu0 0.0
    %893 = vmatpush1.msra.mxu0 %v747
    %894 = vmatprep.subr.mxu0 0.0
    %895 = vmatpush1.msra.mxu0 %v748
    %896 = vmatprep.subr.mxu0 0.0
    %897 = vmatpush1.msra.mxu0 %v749
    %898 = vmatprep.subr.mxu0 0.0
    %899 = vmatpush1.msra.mxu0 %v750
    %900 = vmatprep.subr.mxu0 0.0
    %901 = vmatpush1.msra.mxu0 %v751
    %902 = vmatprep.subr.mxu0 0.0
    %903 = vmatpush1.msra.mxu0 %v752
    %904 = vmatprep.subr.mxu0 0.0
    %905 = vmatpush1.msra.mxu0 %v753
    %906 = vmatprep.subr.mxu0 0.0
    %907 = vmatpush1.msra.mxu0 %v754
    %908 = vmatprep.subr.mxu0 0.0
    %909 = vmatpush1.msra.mxu0 %v755
    %910 = vmatprep.subr.mxu0 0.0
    %911 = vmatpush1.msra.mxu0 %v756
    %912 = vmatprep.subr.mxu0 0.0
    %913 = vmatpush1.msra.mxu0 %v757
    %914 = vmatprep.subr.mxu0 0.0
    %915 = vmatpush1.msra.mxu0 %v758
    %916 = vmatprep.mubr.f32.mxu0 %v777
    %917 = vmatmul.mubr.f32.gmra.mrb[0].mxu0 %v775
    %v918 = vpop.f32.mrb[0].mxu0
    %v919 = vadd.f32 %v849, %v918
    %v920 = vpop.f32.mrb[0].mxu0
    %921 = vdwg.mxu0
    %v922 = vld [vmem:[%s4] sm:$0xff]
    %v923 = vld [vmem:[%s4 + $0x8] sm:$0xff]
    %v924 = vld [vmem:[%s4 + $0x10] sm:$0xff]
    %v925 = vld [vmem:[%s4 + $0x18] sm:$0xff]
    %v926 = vld [vmem:[%s5] sm:$0x1]
    %v928 = vlaneseq
    %v929 = vshrl.u32 %v928, 7
    %v930 = vsub.s32 0, %v929
    %v931 = vrot.slane %v926, %v930
    %v934 = vsel %vm117, %v919, 0
    %936 = vmatprep.subr.mxu0 0.0
    %937 = vmatpush1.msra.mxu0 %v922
    %938 = vmatprep.subr.mxu0 0.0
    %939 = vmatpush1.msra.mxu0 %v923
    %940 = vmatprep.subr.mxu0 0.0
    %941 = vmatpush1.msra.mxu0 %v924
    %942 = vmatprep.subr.mxu0 0.0
    %943 = vmatpush1.msra.mxu0 %v925
    %944 = vmatprep.subr.mxu0 0.0
    %945 = vmatpush1.msra.mxu0 0.0
    %946 = vmatprep.subr.mxu0 0.0
    %947 = vmatpush1.msra.mxu0 0.0
    %948 = vmatprep.subr.mxu0 0.0
    %949 = vmatpush1.msra.mxu0 0.0
    %950 = vmatprep.subr.mxu0 0.0
    %951 = vmatpush1.msra.mxu0 0.0
    %952 = vmatprep.subr.mxu0 0.0
    %953 = vmatpush1.msra.mxu0 0.0
    %954 = vmatprep.subr.mxu0 0.0
    %955 = vmatpush1.msra.mxu0 0.0
    %956 = vmatprep.subr.mxu0 0.0
    %957 = vmatpush1.msra.mxu0 0.0
    %958 = vmatprep.subr.mxu0 0.0
    %959 = vmatpush1.msra.mxu0 0.0
    %960 = vmatprep.subr.mxu0 0.0
    %961 = vmatpush1.msra.mxu0 0.0
    %962 = vmatprep.subr.mxu0 0.0
    %963 = vmatpush1.msra.mxu0 0.0
    %964 = vmatprep.subr.mxu0 0.0
    %965 = vmatpush1.msra.mxu0 0.0
    %966 = vmatprep.subr.mxu0 0.0
    %967 = vmatpush1.msra.mxu0 0.0
    %968 = vmatprep.subr.mxu0 0.0
    %969 = vmatpush1.msra.mxu0 0.0
    %970 = vmatprep.subr.mxu0 0.0
    %971 = vmatpush1.msra.mxu0 0.0
    %972 = vmatprep.subr.mxu0 0.0
    %973 = vmatpush1.msra.mxu0 0.0
    %974 = vmatprep.subr.mxu0 0.0
    %975 = vmatpush1.msra.mxu0 0.0
    %976 = vmatprep.subr.mxu0 0.0
    %977 = vmatpush1.msra.mxu0 0.0
    %978 = vmatprep.subr.mxu0 0.0
    %979 = vmatpush1.msra.mxu0 0.0
    %980 = vmatprep.subr.mxu0 0.0
    %981 = vmatpush1.msra.mxu0 0.0
    %982 = vmatprep.subr.mxu0 0.0
    %983 = vmatpush1.msra.mxu0 0.0
    %984 = vmatprep.subr.mxu0 0.0
    %985 = vmatpush1.msra.mxu0 0.0
    %986 = vmatprep.subr.mxu0 0.0
    %987 = vmatpush1.msra.mxu0 0.0
    %988 = vmatprep.subr.mxu0 0.0
    %989 = vmatpush1.msra.mxu0 0.0
    %990 = vmatprep.subr.mxu0 0.0
    %991 = vmatpush1.msra.mxu0 0.0
    %992 = vmatprep.subr.mxu0 0.0
    %993 = vmatpush1.msra.mxu0 0.0
    %994 = vmatprep.subr.mxu0 0.0
    %995 = vmatpush1.msra.mxu0 0.0
    %996 = vmatprep.subr.mxu0 0.0
    %997 = vmatpush1.msra.mxu0 0.0
    %998 = vmatprep.subr.mxu0 0.0
    %999 = vmatpush1.msra.mxu0 0.0
    %1000 = vmatprep.mubr.f32.mxu0 0.0
    %1001 = vmatmul.mubr.f32.gmra.mrb[0].mxu0 %v934
    %v1002 = vpop.f32.mrb[0].mxu0
    %v1003 = vadd.f32 %v931, %v1002
    %v1004 = vpop.f32.mrb[0].mxu0
    %1005 = vdwg.mxu0
    %1006 = vst [vmem:[#allocation2] sm:$0x3] %v1003
    %v1007 = vld [vmem:[%s6] sm:$0xff]
    %v1008 = vld [vmem:[%s6 + $0x8] sm:$0xff]
    %v1009 = vld [vmem:[%s7] sm:$0xff]
    %v1010 = vld [vmem:[%s7 + $0x8] sm:$0xff]
    %v1011 = vld [vmem:[%s7 + $0x10] sm:$0xff]
    %v1012 = vld [vmem:[%s7 + $0x18] sm:$0xff]
    %v1013 = vld [vmem:[%s7 + $0x20] sm:$0xff]
    %v1014 = vld [vmem:[%s7 + $0x28] sm:$0xff]
    %v1015 = vld [vmem:[%s7 + $0x30] sm:$0xff]
    %v1016 = vld [vmem:[%s7 + $0x38] sm:$0xff]
    %v1017 = vld [vmem:[%s7 + $0x40] sm:$0xff]
    %v1018 = vld [vmem:[%s7 + $0x48] sm:$0xff]
    %v1019 = vld [vmem:[%s7 + $0x50] sm:$0xff]
    %v1020 = vld [vmem:[%s7 + $0x58] sm:$0xff]
    %v1021 = vld [vmem:[%s7 + $0x60] sm:$0xff]
    %v1022 = vld [vmem:[%s7 + $0x68] sm:$0xff]
    %v1023 = vld [vmem:[%s7 + $0x70] sm:$0xff]
    %v1024 = vld [vmem:[%s7 + $0x78] sm:$0xff]
    %v1025 = vld [vmem:[%s8] sm:$0x3]
    %v1027 = vlaneseq
    %v1028 = vshrl.u32 %v1027, 7
    %v1029 = vsub.s32 0, %v1028
    %v1030 = vrot.slane %v1025, %v1029
    %v1031 = vlaneseq
    %v1032 = vshrl.u32 %v1031, 7
    %v1033 = vsub.s32 1, %v1032
    %v1034 = vrot.slane %v1025, %v1033
    %vm1037 = vcmask 523264
    %v1039 = vsel %vm1037, %v1007, 0
    %v1042 = vsel %vm1037, %v1008, 0
    %1044 = vmatprep.subr.mxu0 %v1010
    %1045 = vmatpush1.msra.mxu0 %v1009
    %1046 = vmatprep.subr.mxu0 %v1012
    %1047 = vmatpush1.msra.mxu0 %v1011
    %1048 = vmatprep.subr.mxu0 %v1014
    %1049 = vmatpush1.msra.mxu0 %v1013
    %1050 = vmatprep.subr.mxu0 %v1016
    %1051 = vmatpush1.msra.mxu0 %v1015
    %1052 = vmatprep.subr.mxu0 %v1018
    %1053 = vmatpush1.msra.mxu0 %v1017
    %1054 = vmatprep.subr.mxu0 %v1020
    %1055 = vmatpush1.msra.mxu0 %v1019
    %1056 = vmatprep.subr.mxu0 %v1022
    %1057 = vmatpush1.msra.mxu0 %v1021
    %1058 = vmatprep.subr.mxu0 %v1024
    %1059 = vmatpush1.msra.mxu0 %v1023
    %1060 = vmatprep.subr.mxu0 0.0
    %1061 = vmatpush1.msra.mxu0 0.0
    %1062 = vmatprep.subr.mxu0 0.0
    %1063 = vmatpush1.msra.mxu0 0.0
    %1064 = vmatprep.subr.mxu0 0.0
    %1065 = vmatpush1.msra.mxu0 0.0
    %1066 = vmatprep.subr.mxu0 0.0
    %1067 = vmatpush1.msra.mxu0 0.0
    %1068 = vmatprep.subr.mxu0 0.0
    %1069 = vmatpush1.msra.mxu0 0.0
    %1070 = vmatprep.subr.mxu0 0.0
    %1071 = vmatpush1.msra.mxu0 0.0
    %1072 = vmatprep.subr.mxu0 0.0
    %1073 = vmatpush1.msra.mxu0 0.0
    %1074 = vmatprep.subr.mxu0 0.0
    %1075 = vmatpush1.msra.mxu0 0.0
    %1076 = vmatprep.subr.mxu0 0.0
    %1077 = vmatpush1.msra.mxu0 0.0
    %1078 = vmatprep.subr.mxu0 0.0
    %1079 = vmatpush1.msra.mxu0 0.0
    %1080 = vmatprep.subr.mxu0 0.0
    %1081 = vmatpush1.msra.mxu0 0.0
    %1082 = vmatprep.subr.mxu0 0.0
    %1083 = vmatpush1.msra.mxu0 0.0
    %1084 = vmatprep.subr.mxu0 0.0
    %1085 = vmatpush1.msra.mxu0 0.0
    %1086 = vmatprep.subr.mxu0 0.0
    %1087 = vmatpush1.msra.mxu0 0.0
    %1088 = vmatprep.subr.mxu0 0.0
    %1089 = vmatpush1.msra.mxu0 0.0
    %1090 = vmatprep.subr.mxu0 0.0
    %1091 = vmatpush1.msra.mxu0 0.0
    %1092 = vmatprep.subr.mxu0 0.0
    %1093 = vmatpush1.msra.mxu0 0.0
    %1094 = vmatprep.subr.mxu0 0.0
    %1095 = vmatpush1.msra.mxu0 0.0
    %1096 = vmatprep.subr.mxu0 0.0
    %1097 = vmatpush1.msra.mxu0 0.0
    %1098 = vmatprep.subr.mxu0 0.0
    %1099 = vmatpush1.msra.mxu0 0.0
    %1100 = vmatprep.subr.mxu0 0.0
    %1101 = vmatpush1.msra.mxu0 0.0
    %1102 = vmatprep.subr.mxu0 0.0
    %1103 = vmatpush1.msra.mxu0 0.0
    %1104 = vmatprep.subr.mxu0 0.0
    %1105 = vmatpush1.msra.mxu0 0.0
    %1106 = vmatprep.subr.mxu0 0.0
    %1107 = vmatpush1.msra.mxu0 0.0
    %1108 = vmatprep.mubr.f32.mxu0 0.0
    %1109 = vmatmul.mubr.f32.gmra.mrb[0].mxu0 %v1039
    %v1110 = vpop.f32.mrb[0].mxu0
    %v1111 = vadd.f32 %v1030, %v1110
    %v1112 = vpop.f32.mrb[0].mxu0
    %v1113 = vadd.f32 %v1034, %v1112
    %1114 = vmatprep.mubr.f32.mxu0 0.0
    %1115 = vmatmul.mubr.f32.gmra.mrb[0].mxu0 %v1042
    %v1116 = vpop.f32.mrb[0].mxu0
    %v1117 = vadd.f32 %v1030, %v1116
    %v1118 = vpop.f32.mrb[0].mxu0
    %v1119 = vadd.f32 %v1034, %v1118
    %1120 = vdwg.mxu0
    %v1121 = vld [vmem:[%s9] sm:$0xff]
    %v1122 = vld [vmem:[%s9 + $0x8] sm:$0xff]
    %v1123 = vld [vmem:[%s9 + $0x10] sm:$0xff]
    %v1124 = vld [vmem:[%s9 + $0x18] sm:$0xff]
    %v1125 = vld [vmem:[%s9 + $0x20] sm:$0xff]
    %v1126 = vld [vmem:[%s9 + $0x28] sm:$0xff]
    %v1127 = vld [vmem:[%s9 + $0x30] sm:$0xff]
    %v1128 = vld [vmem:[%s9 + $0x38] sm:$0xff]
    %v1129 = vld [vmem:[%s9 + $0x40] sm:$0xff]
    %v1130 = vld [vmem:[%s9 + $0x48] sm:$0xff]
    %v1131 = vld [vmem:[%s9 + $0x50] sm:$0xff]
    %v1132 = vld [vmem:[%s9 + $0x58] sm:$0xff]
    %v1133 = vld [vmem:[%s9 + $0x60] sm:$0xff]
    %v1134 = vld [vmem:[%s9 + $0x68] sm:$0xff]
    %v1135 = vld [vmem:[%s9 + $0x70] sm:$0xff]
    %v1136 = vld [vmem:[%s9 + $0x78] sm:$0xff]
    %v1137 = vld [vmem:[%s10] sm:$0xff]
    %v1138 = vld [vmem:[%s10 + $0x8] sm:$0xff]
    %v1139 = vxor.u32 %v1111, 2147483648
    %v1140 = vxor.u32 %v1113, 2147483648
    %v1141 = vmul.f32 %v1139, 1.442695
    %v1142 = vpow.pop %v1141
    %v1143 = vmul.f32 %v1140, 1.442695
    %v1144 = vpow.pop %v1143
    %v1145 = vadd.f32 %v1142, 1.0
    %v1146 = vadd.f32 %v1144, 1.0
    %v1147 = vrcp.pop %v1145
    %v1148 = vmul.f32 1.0, %v1147
    %v1149 = vrcp.pop %v1146
    %v1150 = vmul.f32 1.0, %v1149
    %v1151 = vtanh.pop %v1113
    %v1152 = vmul.f32 %v1148, 0.0
    %v1153 = vmul.f32 %v1148, %v1151
    %1155 = vrot.lane.b32.xlu0 %v1153, 64
    %v1156 = vpop.permute.xlu0 %1155
    %v1158 = vadd.f32 %v1152, %v1156
    %v1159 = vtanh.pop %v1158
    %v1160 = vmul.f32 %v1150, %v1159
    %1162 = vset.pattern.permute.xlu0 0
    %1163 = vperm.xlu0 %1162, %v1137
    %v1164 = vpop.permute.xlu0 %1163
    %v1166 = vmul.f32 %v1164, %v1160
    %1168 = vrot.lane.b32.xlu0 %v1160, 64
    %v1169 = vpop.permute.xlu0 %1168
    %v1170 = vsel %vm1037, %v1169, 0
    %1172 = vmatprep.subr.mxu0 %v1122
    %1173 = vmatpush1.msra.mxu0 %v1121
    %1174 = vmatprep.subr.mxu0 %v1124
    %1175 = vmatpush1.msra.mxu0 %v1123
    %1176 = vmatprep.subr.mxu0 %v1126
    %1177 = vmatpush1.msra.mxu0 %v1125
    %1178 = vmatprep.subr.mxu0 %v1128
    %1179 = vmatpush1.msra.mxu0 %v1127
    %1180 = vmatprep.subr.mxu0 %v1130
    %1181 = vmatpush1.msra.mxu0 %v1129
    %1182 = vmatprep.subr.mxu0 %v1132
    %1183 = vmatpush1.msra.mxu0 %v1131
    %1184 = vmatprep.subr.mxu0 %v1134
    %1185 = vmatpush1.msra.mxu0 %v1133
    %1186 = vmatprep.subr.mxu0 %v1136
    %1187 = vmatpush1.msra.mxu0 %v1135
    %1188 = vmatprep.subr.mxu0 0.0
    %1189 = vmatpush1.msra.mxu0 0.0
    %1190 = vmatprep.subr.mxu0 0.0
    %1191 = vmatpush1.msra.mxu0 0.0
    %1192 = vmatprep.subr.mxu0 0.0
    %1193 = vmatpush1.msra.mxu0 0.0
    %1194 = vmatprep.subr.mxu0 0.0
    %1195 = vmatpush1.msra.mxu0 0.0
    %1196 = vmatprep.subr.mxu0 0.0
    %1197 = vmatpush1.msra.mxu0 0.0
    %1198 = vmatprep.subr.mxu0 0.0
    %1199 = vmatpush1.msra.mxu0 0.0
    %1200 = vmatprep.subr.mxu0 0.0
    %1201 = vmatpush1.msra.mxu0 0.0
    %1202 = vmatprep.subr.mxu0 0.0
    %1203 = vmatpush1.msra.mxu0 0.0
    %1204 = vmatprep.subr.mxu0 0.0
    %1205 = vmatpush1.msra.mxu0 0.0
    %1206 = vmatprep.subr.mxu0 0.0
    %1207 = vmatpush1.msra.mxu0 0.0
    %1208 = vmatprep.subr.mxu0 0.0
    %1209 = vmatpush1.msra.mxu0 0.0
    %1210 = vmatprep.subr.mxu0 0.0
    %1211 = vmatpush1.msra.mxu0 0.0
    %1212 = vmatprep.subr.mxu0 0.0
    %1213 = vmatpush1.msra.mxu0 0.0
    %1214 = vmatprep.subr.mxu0 0.0
    %1215 = vmatpush1.msra.mxu0 0.0
    %1216 = vmatprep.subr.mxu0 0.0
    %1217 = vmatpush1.msra.mxu0 0.0
    %1218 = vmatprep.subr.mxu0 0.0
    %1219 = vmatpush1.msra.mxu0 0.0
    %1220 = vmatprep.subr.mxu0 0.0
    %1221 = vmatpush1.msra.mxu0 0.0
    %1222 = vmatprep.subr.mxu0 0.0
    %1223 = vmatpush1.msra.mxu0 0.0
    %1224 = vmatprep.subr.mxu0 0.0
    %1225 = vmatpush1.msra.mxu0 0.0
    %1226 = vmatprep.subr.mxu0 0.0
    %1227 = vmatpush1.msra.mxu0 0.0
    %1228 = vmatprep.subr.mxu0 0.0
    %1229 = vmatpush1.msra.mxu0 0.0
    %1230 = vmatprep.subr.mxu0 0.0
    %1231 = vmatpush1.msra.mxu0 0.0
    %1232 = vmatprep.subr.mxu0 0.0
    %1233 = vmatpush1.msra.mxu0 0.0
    %1234 = vmatprep.subr.mxu0 0.0
    %1235 = vmatpush1.msra.mxu0 0.0
    %1236 = vmatprep.mubr.f32.mxu0 0.0
    %1237 = vmatmul.mubr.f32.gmra.mrb[0].mxu0 %v1170
    %v1238 = vpop.f32.mrb[0].mxu0
    %v1239 = vadd.f32 0.0, %v1238
    %v1240 = vpop.f32.mrb[0].mxu0
    %v1241 = vadd.f32 0.0, %v1240
    %1242 = vdwg.mxu0
    %v1245 = vrot.slane %v1239, 6
    %v1246 = vrot.slane %v1241, 6
    %v1249 = vadd.f32 %v1111, %v1245
    %v1250 = vadd.f32 %v1113, %v1246
    %v1251 = vxor.u32 %v1249, 2147483648
    %v1252 = vxor.u32 %v1250, 2147483648
    %v1253 = vmul.f32 %v1251, 1.442695
    %v1254 = vpow.pop %v1253
    %v1255 = vmul.f32 %v1252, 1.442695
    %v1256 = vpow.pop %v1255
    %v1257 = vadd.f32 %v1254, 1.0
    %v1258 = vadd.f32 %v1256, 1.0
    %v1259 = vrcp.pop %v1257
    %v1260 = vmul.f32 1.0, %v1259
    %v1261 = vrcp.pop %v1258
    %v1262 = vmul.f32 1.0, %v1261
    %v1263 = vtanh.pop %v1250
    %v1265 = vrot.slane %v1158, 6
    %v1267 = vmul.f32 %v1260, %v1265
    %v1268 = vmul.f32 %v1260, %v1263
    %1270 = vrot.lane.b32.xlu0 %v1268, 64
    %v1271 = vpop.permute.xlu0 %1270
    %v1273 = vadd.f32 %v1267, %v1271
    %v1274 = vtanh.pop %v1273
    %v1275 = vmul.f32 %v1262, %v1274
    %v1276 = vmul.f32 %v1164, %v1275
    %v1278 = vrot.slane %v1276, 2
    %v1280 = vadd.f32 %v1166, %v1278
    %v1282 = vrot.slane %v1275, 2
    %1283 = vrot.lane.b32.xlu0 %v1282, 64
    %v1284 = vpop.permute.xlu0 %1283
    %v1285 = vsel %vm1037, %v1284, 0
    %1287 = vmatprep.subr.mxu0 %v1122
    %1288 = vmatpush1.msra.mxu0 %v1121
    %1289 = vmatprep.subr.mxu0 %v1124
    %1290 = vmatpush1.msra.mxu0 %v1123
    %1291 = vmatprep.subr.mxu0 %v1126
    %1292 = vmatpush1.msra.mxu0 %v1125
    %1293 = vmatprep.subr.mxu0 %v1128
    %1294 = vmatpush1.msra.mxu0 %v1127
    %1295 = vmatprep.subr.mxu0 %v1130
    %1296 = vmatpush1.msra.mxu0 %v1129
    %1297 = vmatprep.subr.mxu0 %v1132
    %1298 = vmatpush1.msra.mxu0 %v1131
    %1299 = vmatprep.subr.mxu0 %v1134
    %1300 = vmatpush1.msra.mxu0 %v1133
    %1301 = vmatprep.subr.mxu0 %v1136
    %1302 = vmatpush1.msra.mxu0 %v1135
    %1303 = vmatprep.subr.mxu0 0.0
    %1304 = vmatpush1.msra.mxu0 0.0
    %1305 = vmatprep.subr.mxu0 0.0
    %1306 = vmatpush1.msra.mxu0 0.0
    %1307 = vmatprep.subr.mxu0 0.0
    %1308 = vmatpush1.msra.mxu0 0.0
    %1309 = vmatprep.subr.mxu0 0.0
    %1310 = vmatpush1.msra.mxu0 0.0
    %1311 = vmatprep.subr.mxu0 0.0
    %1312 = vmatpush1.msra.mxu0 0.0
    %1313 = vmatprep.subr.mxu0 0.0
    %1314 = vmatpush1.msra.mxu0 0.0
    %1315 = vmatprep.subr.mxu0 0.0
    %1316 = vmatpush1.msra.mxu0 0.0
    %1317 = vmatprep.subr.mxu0 0.0
    %1318 = vmatpush1.msra.mxu0 0.0
    %1319 = vmatprep.subr.mxu0 0.0
    %1320 = vmatpush1.msra.mxu0 0.0
    %1321 = vmatprep.subr.mxu0 0.0
    %1322 = vmatpush1.msra.mxu0 0.0
    %1323 = vmatprep.subr.mxu0 0.0
    %1324 = vmatpush1.msra.mxu0 0.0
    %1325 = vmatprep.subr.mxu0 0.0
    %1326 = vmatpush1.msra.mxu0 0.0
    %1327 = vmatprep.subr.mxu0 0.0
    %1328 = vmatpush1.msra.mxu0 0.0
    %1329 = vmatprep.subr.mxu0 0.0
    %1330 = vmatpush1.msra.mxu0 0.0
    %1331 = vmatprep.subr.mxu0 0.0
    %1332 = vmatpush1.msra.mxu0 0.0
    %1333 = vmatprep.subr.mxu0 0.0
    %1334 = vmatpush1.msra.mxu0 0.0
    %1335 = vmatprep.subr.mxu0 0.0
    %1336 = vmatpush1.msra.mxu0 0.0
    %1337 = vmatprep.subr.mxu0 0.0
    %1338 = vmatpush1.msra.mxu0 0.0
    %1339 = vmatprep.subr.mxu0 0.0
    %1340 = vmatpush1.msra.mxu0 0.0
    %1341 = vmatprep.subr.mxu0 0.0
    %1342 = vmatpush1.msra.mxu0 0.0
    %1343 = vmatprep.subr.mxu0 0.0
    %1344 = vmatpush1.msra.mxu0 0.0
    %1345 = vmatprep.subr.mxu0 0.0
    %1346 = vmatpush1.msra.mxu0 0.0
    %1347 = vmatprep.subr.mxu0 0.0
    %1348 = vmatpush1.msra.mxu0 0.0
    %1349 = vmatprep.subr.mxu0 0.0
    %1350 = vmatpush1.msra.mxu0 0.0
    %1351 = vmatprep.mubr.f32.mxu0 0.0
    %1352 = vmatmul.mubr.f32.gmra.mrb[0].mxu0 %v1285
    %v1353 = vpop.f32.mrb[0].mxu0
    %v1354 = vadd.f32 0.0, %v1353
    %v1355 = vpop.f32.mrb[0].mxu0
    %v1356 = vadd.f32 0.0, %v1355
    %1357 = vdwg.mxu0
    %v1360 = vrot.slane %v1354, 4
    %v1361 = vrot.slane %v1356, 4
    %v1364 = vadd.f32 %v1111, %v1360
    %v1365 = vadd.f32 %v1113, %v1361
    %v1366 = vxor.u32 %v1364, 2147483648
    %v1367 = vxor.u32 %v1365, 2147483648
    %v1368 = vmul.f32 %v1366, 1.442695
    %v1369 = vpow.pop %v1368
    %v1370 = vmul.f32 %v1367, 1.442695
    %v1371 = vpow.pop %v1370
    %v1372 = vadd.f32 %v1369, 1.0
    %v1373 = vadd.f32 %v1371, 1.0
    %v1374 = vrcp.pop %v1372
    %v1375 = vmul.f32 1.0, %v1374
    %v1376 = vrcp.pop %v1373
    %v1377 = vmul.f32 1.0, %v1376
    %v1378 = vtanh.pop %v1365
    %v1380 = vrot.slane %v1273, 6
    %v1382 = vmul.f32 %v1375, %v1380
    %v1383 = vmul.f32 %v1375, %v1378
    %1385 = vrot.lane.b32.xlu0 %v1383, 64
    %v1386 = vpop.permute.xlu0 %1385
    %v1388 = vadd.f32 %v1382, %v1386
    %v1389 = vtanh.pop %v1388
    %v1390 = vmul.f32 %v1377, %v1389
    %v1391 = vmul.f32 %v1164, %v1390
    %v1393 = vrot.slane %v1391, 4
    %v1395 = vadd.f32 %v1280, %v1393
    %v1397 = vrot.slane %v1390, 4
    %1398 = vrot.lane.b32.xlu0 %v1397, 64
    %v1399 = vpop.permute.xlu0 %1398
    %v1400 = vsel %vm1037, %v1399, 0
    %1402 = vmatprep.subr.mxu0 %v1122
    %1403 = vmatpush1.msra.mxu0 %v1121
    %1404 = vmatprep.subr.mxu0 %v1124
    %1405 = vmatpush1.msra.mxu0 %v1123
    %1406 = vmatprep.subr.mxu0 %v1126
    %1407 = vmatpush1.msra.mxu0 %v1125
    %1408 = vmatprep.subr.mxu0 %v1128
    %1409 = vmatpush1.msra.mxu0 %v1127
    %1410 = vmatprep.subr.mxu0 %v1130
    %1411 = vmatpush1.msra.mxu0 %v1129
    %1412 = vmatprep.subr.mxu0 %v1132
    %1413 = vmatpush1.msra.mxu0 %v1131
    %1414 = vmatprep.subr.mxu0 %v1134
    %1415 = vmatpush1.msra.mxu0 %v1133
    %1416 = vmatprep.subr.mxu0 %v1136
    %1417 = vmatpush1.msra.mxu0 %v1135
    %1418 = vmatprep.subr.mxu0 0.0
    %1419 = vmatpush1.msra.mxu0 0.0
    %1420 = vmatprep.subr.mxu0 0.0
    %1421 = vmatpush1.msra.mxu0 0.0
    %1422 = vmatprep.subr.mxu0 0.0
    %1423 = vmatpush1.msra.mxu0 0.0
    %1424 = vmatprep.subr.mxu0 0.0
    %1425 = vmatpush1.msra.mxu0 0.0
    %1426 = vmatprep.subr.mxu0 0.0
    %1427 = vmatpush1.msra.mxu0 0.0
    %1428 = vmatprep.subr.mxu0 0.0
    %1429 = vmatpush1.msra.mxu0 0.0
    %1430 = vmatprep.subr.mxu0 0.0
    %1431 = vmatpush1.msra.mxu0 0.0
    %1432 = vmatprep.subr.mxu0 0.0
    %1433 = vmatpush1.msra.mxu0 0.0
    %1434 = vmatprep.subr.mxu0 0.0
    %1435 = vmatpush1.msra.mxu0 0.0
    %1436 = vmatprep.subr.mxu0 0.0
    %1437 = vmatpush1.msra.mxu0 0.0
    %1438 = vmatprep.subr.mxu0 0.0
    %1439 = vmatpush1.msra.mxu0 0.0
    %1440 = vmatprep.subr.mxu0 0.0
    %1441 = vmatpush1.msra.mxu0 0.0
    %1442 = vmatprep.subr.mxu0 0.0
    %1443 = vmatpush1.msra.mxu0 0.0
    %1444 = vmatprep.subr.mxu0 0.0
    %1445 = vmatpush1.msra.mxu0 0.0
    %1446 = vmatprep.subr.mxu0 0.0
    %1447 = vmatpush1.msra.mxu0 0.0
    %1448 = vmatprep.subr.mxu0 0.0
    %1449 = vmatpush1.msra.mxu0 0.0
    %1450 = vmatprep.subr.mxu0 0.0
    %1451 = vmatpush1.msra.mxu0 0.0
    %1452 = vmatprep.subr.mxu0 0.0
    %1453 = vmatpush1.msra.mxu0 0.0
    %1454 = vmatprep.subr.mxu0 0.0
    %1455 = vmatpush1.msra.mxu0 0.0
    %1456 = vmatprep.subr.mxu0 0.0
    %1457 = vmatpush1.msra.mxu0 0.0
    %1458 = vmatprep.subr.mxu0 0.0
    %1459 = vmatpush1.msra.mxu0 0.0
    %1460 = vmatprep.subr.mxu0 0.0
    %1461 = vmatpush1.msra.mxu0 0.0
    %1462 = vmatprep.subr.mxu0 0.0
    %1463 = vmatpush1.msra.mxu0 0.0
    %1464 = vmatprep.subr.mxu0 0.0
    %1465 = vmatpush1.msra.mxu0 0.0
    %1466 = vmatprep.mubr.f32.mxu0 0.0
    %1467 = vmatmul.mubr.f32.gmra.mrb[0].mxu0 %v1400
    %v1468 = vpop.f32.mrb[0].mxu0
    %v1469 = vadd.f32 0.0, %v1468
    %v1470 = vpop.f32.mrb[0].mxu0
    %v1471 = vadd.f32 0.0, %v1470
    %1472 = vdwg.mxu0
    %v1475 = vrot.slane %v1469, 2
    %v1476 = vrot.slane %v1471, 2
    %v1479 = vadd.f32 %v1111, %v1475
    %v1480 = vadd.f32 %v1113, %v1476
    %v1481 = vxor.u32 %v1479, 2147483648
    %v1482 = vxor.u32 %v1480, 2147483648
    %v1483 = vmul.f32 %v1481, 1.442695
    %v1484 = vpow.pop %v1483
    %v1485 = vmul.f32 %v1482, 1.442695
    %v1486 = vpow.pop %v1485
    %v1487 = vadd.f32 %v1484, 1.0
    %v1488 = vadd.f32 %v1486, 1.0
    %v1489 = vrcp.pop %v1487
    %v1490 = vmul.f32 1.0, %v1489
    %v1491 = vrcp.pop %v1488
    %v1492 = vmul.f32 1.0, %v1491
    %v1493 = vtanh.pop %v1480
    %v1495 = vrot.slane %v1388, 6
    %v1497 = vmul.f32 %v1490, %v1495
    %v1498 = vmul.f32 %v1490, %v1493
    %1500 = vrot.lane.b32.xlu0 %v1498, 64
    %v1501 = vpop.permute.xlu0 %1500
    %v1503 = vadd.f32 %v1497, %v1501
    %v1504 = vtanh.pop %v1503
    %v1505 = vmul.f32 %v1492, %v1504
    %v1506 = vmul.f32 %v1164, %v1505
    %v1508 = vrot.slane %v1506, 6
    %v1510 = vadd.f32 %v1395, %v1508
    %v1512 = vrot.slane %v1505, 6
    %1513 = vrot.lane.b32.xlu0 %v1512, 64
    %v1514 = vpop.permute.xlu0 %1513
    %v1515 = vsel %vm1037, %v1514, 0
    %1517 = vmatprep.subr.mxu0 %v1122
    %1518 = vmatpush1.msra.mxu0 %v1121
    %1519 = vmatprep.subr.mxu0 %v1124
    %1520 = vmatpush1.msra.mxu0 %v1123
    %1521 = vmatprep.subr.mxu0 %v1126
    %1522 = vmatpush1.msra.mxu0 %v1125
    %1523 = vmatprep.subr.mxu0 %v1128
    %1524 = vmatpush1.msra.mxu0 %v1127
    %1525 = vmatprep.subr.mxu0 %v1130
    %1526 = vmatpush1.msra.mxu0 %v1129
    %1527 = vmatprep.subr.mxu0 %v1132
    %1528 = vmatpush1.msra.mxu0 %v1131
    %1529 = vmatprep.subr.mxu0 %v1134
    %1530 = vmatpush1.msra.mxu0 %v1133
    %1531 = vmatprep.subr.mxu0 %v1136
    %1532 = vmatpush1.msra.mxu0 %v1135
    %1533 = vmatprep.subr.mxu0 0.0
    %1534 = vmatpush1.msra.mxu0 0.0
    %1535 = vmatprep.subr.mxu0 0.0
    %1536 = vmatpush1.msra.mxu0 0.0
    %1537 = vmatprep.subr.mxu0 0.0
    %1538 = vmatpush1.msra.mxu0 0.0
    %1539 = vmatprep.subr.mxu0 0.0
    %1540 = vmatpush1.msra.mxu0 0.0
    %1541 = vmatprep.subr.mxu0 0.0
    %1542 = vmatpush1.msra.mxu0 0.0
    %1543 = vmatprep.subr.mxu0 0.0
    %1544 = vmatpush1.msra.mxu0 0.0
    %1545 = vmatprep.subr.mxu0 0.0
    %1546 = vmatpush1.msra.mxu0 0.0
    %1547 = vmatprep.subr.mxu0 0.0
    %1548 = vmatpush1.msra.mxu0 0.0
    %1549 = vmatprep.subr.mxu0 0.0
    %1550 = vmatpush1.msra.mxu0 0.0
    %1551 = vmatprep.subr.mxu0 0.0
    %1552 = vmatpush1.msra.mxu0 0.0
    %1553 = vmatprep.subr.mxu0 0.0
    %1554 = vmatpush1.msra.mxu0 0.0
    %1555 = vmatprep.subr.mxu0 0.0
    %1556 = vmatpush1.msra.mxu0 0.0
    %1557 = vmatprep.subr.mxu0 0.0
    %1558 = vmatpush1.msra.mxu0 0.0
    %1559 = vmatprep.subr.mxu0 0.0
    %1560 = vmatpush1.msra.mxu0 0.0
    %1561 = vmatprep.subr.mxu0 0.0
    %1562 = vmatpush1.msra.mxu0 0.0
    %1563 = vmatprep.subr.mxu0 0.0
    %1564 = vmatpush1.msra.mxu0 0.0
    %1565 = vmatprep.subr.mxu0 0.0
    %1566 = vmatpush1.msra.mxu0 0.0
    %1567 = vmatprep.subr.mxu0 0.0
    %1568 = vmatpush1.msra.mxu0 0.0
    %1569 = vmatprep.subr.mxu0 0.0
    %1570 = vmatpush1.msra.mxu0 0.0
    %1571 = vmatprep.subr.mxu0 0.0
    %1572 = vmatpush1.msra.mxu0 0.0
    %1573 = vmatprep.subr.mxu0 0.0
    %1574 = vmatpush1.msra.mxu0 0.0
    %1575 = vmatprep.subr.mxu0 0.0
    %1576 = vmatpush1.msra.mxu0 0.0
    %1577 = vmatprep.subr.mxu0 0.0
    %1578 = vmatpush1.msra.mxu0 0.0
    %1579 = vmatprep.subr.mxu0 0.0
    %1580 = vmatpush1.msra.mxu0 0.0
    %1581 = vmatprep.mubr.f32.mxu0 0.0
    %1582 = vmatmul.mubr.f32.gmra.mrb[0].mxu0 %v1515
    %v1583 = vpop.f32.mrb[0].mxu0
    %v1584 = vadd.f32 0.0, %v1583
    %v1585 = vpop.f32.mrb[0].mxu0
    %v1586 = vadd.f32 0.0, %v1585
    %1587 = vdwg.mxu0
    %v1588 = vadd.f32 %v1117, %v1584
    %v1589 = vadd.f32 %v1119, %v1586
    %v1590 = vxor.u32 %v1588, 2147483648
    %v1591 = vxor.u32 %v1589, 2147483648
    %v1592 = vmul.f32 %v1590, 1.442695
    %v1593 = vpow.pop %v1592
    %v1594 = vmul.f32 %v1591, 1.442695
    %v1595 = vpow.pop %v1594
    %v1596 = vadd.f32 %v1593, 1.0
    %v1597 = vadd.f32 %v1595, 1.0
    %v1598 = vrcp.pop %v1596
    %v1599 = vmul.f32 1.0, %v1598
    %v1600 = vrcp.pop %v1597
    %v1601 = vmul.f32 1.0, %v1600
    %v1602 = vtanh.pop %v1589
    %v1604 = vrot.slane %v1503, 6
    %v1606 = vmul.f32 %v1599, %v1604
    %v1607 = vmul.f32 %v1599, %v1602
    %1609 = vrot.lane.b32.xlu0 %v1607, 64
    %v1610 = vpop.permute.xlu0 %1609
    %v1612 = vadd.f32 %v1606, %v1610
    %v1613 = vtanh.pop %v1612
    %v1614 = vmul.f32 %v1601, %v1613
    %1616 = vset.pattern.permute.xlu0 0
    %1617 = vperm.xlu0 %1616, %v1138
    %v1618 = vpop.permute.xlu0 %1617
    %v1620 = vmul.f32 %v1618, %v1614
    %v1621 = vadd.f32 %v1510, %v1620
    %1623 = vrot.lane.b32.xlu0 %v1614, 64
    %v1624 = vpop.permute.xlu0 %1623
    %v1625 = vsel %vm1037, %v1624, 0
    %1627 = vmatprep.subr.mxu0 %v1122
    %1628 = vmatpush1.msra.mxu0 %v1121
    %1629 = vmatprep.subr.mxu0 %v1124
    %1630 = vmatpush1.msra.mxu0 %v1123
    %1631 = vmatprep.subr.mxu0 %v1126
    %1632 = vmatpush1.msra.mxu0 %v1125
    %1633 = vmatprep.subr.mxu0 %v1128
    %1634 = vmatpush1.msra.mxu0 %v1127
    %1635 = vmatprep.subr.mxu0 %v1130
    %1636 = vmatpush1.msra.mxu0 %v1129
    %1637 = vmatprep.subr.mxu0 %v1132
    %1638 = vmatpush1.msra.mxu0 %v1131
    %1639 = vmatprep.subr.mxu0 %v1134
    %1640 = vmatpush1.msra.mxu0 %v1133
    %1641 = vmatprep.subr.mxu0 %v1136
    %1642 = vmatpush1.msra.mxu0 %v1135
    %1643 = vmatprep.subr.mxu0 0.0
    %1644 = vmatpush1.msra.mxu0 0.0
    %1645 = vmatprep.subr.mxu0 0.0
    %1646 = vmatpush1.msra.mxu0 0.0
    %1647 = vmatprep.subr.mxu0 0.0
    %1648 = vmatpush1.msra.mxu0 0.0
    %1649 = vmatprep.subr.mxu0 0.0
    %1650 = vmatpush1.msra.mxu0 0.0
    %1651 = vmatprep.subr.mxu0 0.0
    %1652 = vmatpush1.msra.mxu0 0.0
    %1653 = vmatprep.subr.mxu0 0.0
    %1654 = vmatpush1.msra.mxu0 0.0
    %1655 = vmatprep.subr.mxu0 0.0
    %1656 = vmatpush1.msra.mxu0 0.0
    %1657 = vmatprep.subr.mxu0 0.0
    %1658 = vmatpush1.msra.mxu0 0.0
    %1659 = vmatprep.subr.mxu0 0.0
    %1660 = vmatpush1.msra.mxu0 0.0
    %1661 = vmatprep.subr.mxu0 0.0
    %1662 = vmatpush1.msra.mxu0 0.0
    %1663 = vmatprep.subr.mxu0 0.0
    %1664 = vmatpush1.msra.mxu0 0.0
    %1665 = vmatprep.subr.mxu0 0.0
    %1666 = vmatpush1.msra.mxu0 0.0
    %1667 = vmatprep.subr.mxu0 0.0
    %1668 = vmatpush1.msra.mxu0 0.0
    %1669 = vmatprep.subr.mxu0 0.0
    %1670 = vmatpush1.msra.mxu0 0.0
    %1671 = vmatprep.subr.mxu0 0.0
    %1672 = vmatpush1.msra.mxu0 0.0
    %1673 = vmatprep.subr.mxu0 0.0
    %1674 = vmatpush1.msra.mxu0 0.0
    %1675 = vmatprep.subr.mxu0 0.0
    %1676 = vmatpush1.msra.mxu0 0.0
    %1677 = vmatprep.subr.mxu0 0.0
    %1678 = vmatpush1.msra.mxu0 0.0
    %1679 = vmatprep.subr.mxu0 0.0
    %1680 = vmatpush1.msra.mxu0 0.0
    %1681 = vmatprep.subr.mxu0 0.0
    %1682 = vmatpush1.msra.mxu0 0.0
    %1683 = vmatprep.subr.mxu0 0.0
    %1684 = vmatpush1.msra.mxu0 0.0
    %1685 = vmatprep.subr.mxu0 0.0
    %1686 = vmatpush1.msra.mxu0 0.0
    %1687 = vmatprep.subr.mxu0 0.0
    %1688 = vmatpush1.msra.mxu0 0.0
    %1689 = vmatprep.subr.mxu0 0.0
    %1690 = vmatpush1.msra.mxu0 0.0
    %1691 = vmatprep.mubr.f32.mxu0 0.0
    %1692 = vmatmul.mubr.f32.gmra.mrb[0].mxu0 %v1625
    %v1693 = vpop.f32.mrb[0].mxu0
    %v1694 = vadd.f32 0.0, %v1693
    %v1695 = vpop.f32.mrb[0].mxu0
    %v1696 = vadd.f32 0.0, %v1695
    %1697 = vdwg.mxu0
    %v1700 = vrot.slane %v1694, 6
    %v1701 = vrot.slane %v1696, 6
    %v1704 = vadd.f32 %v1117, %v1700
    %v1705 = vadd.f32 %v1119, %v1701
    %v1706 = vxor.u32 %v1704, 2147483648
    %v1707 = vxor.u32 %v1705, 2147483648
    %v1708 = vmul.f32 %v1706, 1.442695
    %v1709 = vpow.pop %v1708
    %v1710 = vmul.f32 %v1707, 1.442695
    %v1711 = vpow.pop %v1710
    %v1712 = vadd.f32 %v1709, 1.0
    %v1713 = vadd.f32 %v1711, 1.0
    %v1714 = vrcp.pop %v1712
    %v1715 = vmul.f32 1.0, %v1714
    %v1716 = vrcp.pop %v1713
    %v1717 = vmul.f32 1.0, %v1716
    %v1718 = vtanh.pop %v1705
    %v1720 = vrot.slane %v1612, 6
    %v1722 = vmul.f32 %v1715, %v1720
    %v1723 = vmul.f32 %v1715, %v1718
    %1725 = vrot.lane.b32.xlu0 %v1723, 64
    %v1726 = vpop.permute.xlu0 %1725
    %v1728 = vadd.f32 %v1722, %v1726
    %v1729 = vtanh.pop %v1728
    %v1730 = vmul.f32 %v1717, %v1729
    %v1731 = vmul.f32 %v1618, %v1730
    %v1733 = vrot.slane %v1731, 2
    %v1735 = vadd.f32 %v1621, %v1733
    %v1737 = vrot.slane %v1730, 2
    %1738 = vrot.lane.b32.xlu0 %v1737, 64
    %v1739 = vpop.permute.xlu0 %1738
    %v1740 = vsel %vm1037, %v1739, 0
    %1742 = vmatprep.subr.mxu0 %v1122
    %1743 = vmatpush1.msra.mxu0 %v1121
    %1744 = vmatprep.subr.mxu0 %v1124
    %1745 = vmatpush1.msra.mxu0 %v1123
    %1746 = vmatprep.subr.mxu0 %v1126
    %1747 = vmatpush1.msra.mxu0 %v1125
    %1748 = vmatprep.subr.mxu0 %v1128
    %1749 = vmatpush1.msra.mxu0 %v1127
    %1750 = vmatprep.subr.mxu0 %v1130
    %1751 = vmatpush1.msra.mxu0 %v1129
    %1752 = vmatprep.subr.mxu0 %v1132
    %1753 = vmatpush1.msra.mxu0 %v1131
    %1754 = vmatprep.subr.mxu0 %v1134
    %1755 = vmatpush1.msra.mxu0 %v1133
    %1756 = vmatprep.subr.mxu0 %v1136
    %1757 = vmatpush1.msra.mxu0 %v1135
    %1758 = vmatprep.subr.mxu0 0.0
    %1759 = vmatpush1.msra.mxu0 0.0
    %1760 = vmatprep.subr.mxu0 0.0
    %1761 = vmatpush1.msra.mxu0 0.0
    %1762 = vmatprep.subr.mxu0 0.0
    %1763 = vmatpush1.msra.mxu0 0.0
    %1764 = vmatprep.subr.mxu0 0.0
    %1765 = vmatpush1.msra.mxu0 0.0
    %1766 = vmatprep.subr.mxu0 0.0
    %1767 = vmatpush1.msra.mxu0 0.0
    %1768 = vmatprep.subr.mxu0 0.0
    %1769 = vmatpush1.msra.mxu0 0.0
    %1770 = vmatprep.subr.mxu0 0.0
    %1771 = vmatpush1.msra.mxu0 0.0
    %1772 = vmatprep.subr.mxu0 0.0
    %1773 = vmatpush1.msra.mxu0 0.0
    %1774 = vmatprep.subr.mxu0 0.0
    %1775 = vmatpush1.msra.mxu0 0.0
    %1776 = vmatprep.subr.mxu0 0.0
    %1777 = vmatpush1.msra.mxu0 0.0
    %1778 = vmatprep.subr.mxu0 0.0
    %1779 = vmatpush1.msra.mxu0 0.0
    %1780 = vmatprep.subr.mxu0 0.0
    %1781 = vmatpush1.msra.mxu0 0.0
    %1782 = vmatprep.subr.mxu0 0.0
    %1783 = vmatpush1.msra.mxu0 0.0
    %1784 = vmatprep.subr.mxu0 0.0
    %1785 = vmatpush1.msra.mxu0 0.0
    %1786 = vmatprep.subr.mxu0 0.0
    %1787 = vmatpush1.msra.mxu0 0.0
    %1788 = vmatprep.subr.mxu0 0.0
    %1789 = vmatpush1.msra.mxu0 0.0
    %1790 = vmatprep.subr.mxu0 0.0
    %1791 = vmatpush1.msra.mxu0 0.0
    %1792 = vmatprep.subr.mxu0 0.0
    %1793 = vmatpush1.msra.mxu0 0.0
    %1794 = vmatprep.subr.mxu0 0.0
    %1795 = vmatpush1.msra.mxu0 0.0
    %1796 = vmatprep.subr.mxu0 0.0
    %1797 = vmatpush1.msra.mxu0 0.0
    %1798 = vmatprep.subr.mxu0 0.0
    %1799 = vmatpush1.msra.mxu0 0.0
    %1800 = vmatprep.subr.mxu0 0.0
    %1801 = vmatpush1.msra.mxu0 0.0
    %1802 = vmatprep.subr.mxu0 0.0
    %1803 = vmatpush1.msra.mxu0 0.0
    %1804 = vmatprep.subr.mxu0 0.0
    %1805 = vmatpush1.msra.mxu0 0.0
    %1806 = vmatprep.mubr.f32.mxu0 0.0
    %1807 = vmatmul.mubr.f32.gmra.mrb[0].mxu0 %v1740
    %v1808 = vpop.f32.mrb[0].mxu0
    %v1809 = vadd.f32 0.0, %v1808
    %v1810 = vpop.f32.mrb[0].mxu0
    %v1811 = vadd.f32 0.0, %v1810
    %1812 = vdwg.mxu0
    %v1815 = vrot.slane %v1809, 4
    %v1816 = vrot.slane %v1811, 4
    %v1819 = vadd.f32 %v1117, %v1815
    %v1820 = vadd.f32 %v1119, %v1816
    %v1821 = vxor.u32 %v1819, 2147483648
    %v1822 = vxor.u32 %v1820, 2147483648
    %v1823 = vmul.f32 %v1821, 1.442695
    %v1824 = vpow.pop %v1823
    %v1825 = vmul.f32 %v1822, 1.442695
    %v1826 = vpow.pop %v1825
    %v1827 = vadd.f32 %v1824, 1.0
    %v1828 = vadd.f32 %v1826, 1.0
    %v1829 = vrcp.pop %v1827
    %v1830 = vmul.f32 1.0, %v1829
    %v1831 = vrcp.pop %v1828
    %v1832 = vmul.f32 1.0, %v1831
    %v1833 = vtanh.pop %v1820
    %v1835 = vrot.slane %v1728, 6
    %v1837 = vmul.f32 %v1830, %v1835
    %v1838 = vmul.f32 %v1830, %v1833
    %1840 = vrot.lane.b32.xlu0 %v1838, 64
    %v1841 = vpop.permute.xlu0 %1840
    %v1843 = vadd.f32 %v1837, %v1841
    %v1844 = vtanh.pop %v1843
    %v1845 = vmul.f32 %v1832, %v1844
    %v1846 = vmul.f32 %v1618, %v1845
    %v1848 = vrot.slane %v1846, 4
    %v1850 = vadd.f32 %v1735, %v1848
    %v1852 = vrot.slane %v1845, 4
    %1853 = vrot.lane.b32.xlu0 %v1852, 64
    %v1854 = vpop.permute.xlu0 %1853
    %v1855 = vsel %vm1037, %v1854, 0
    %1857 = vmatprep.subr.mxu0 %v1122
    %1858 = vmatpush1.msra.mxu0 %v1121
    %1859 = vmatprep.subr.mxu0 %v1124
    %1860 = vmatpush1.msra.mxu0 %v1123
    %1861 = vmatprep.subr.mxu0 %v1126
    %1862 = vmatpush1.msra.mxu0 %v1125
    %1863 = vmatprep.subr.mxu0 %v1128
    %1864 = vmatpush1.msra.mxu0 %v1127
    %1865 = vmatprep.subr.mxu0 %v1130
    %1866 = vmatpush1.msra.mxu0 %v1129
    %1867 = vmatprep.subr.mxu0 %v1132
    %1868 = vmatpush1.msra.mxu0 %v1131
    %1869 = vmatprep.subr.mxu0 %v1134
    %1870 = vmatpush1.msra.mxu0 %v1133
    %1871 = vmatprep.subr.mxu0 %v1136
    %1872 = vmatpush1.msra.mxu0 %v1135
    %1873 = vmatprep.subr.mxu0 0.0
    %1874 = vmatpush1.msra.mxu0 0.0
    %1875 = vmatprep.subr.mxu0 0.0
    %1876 = vmatpush1.msra.mxu0 0.0
    %1877 = vmatprep.subr.mxu0 0.0
    %1878 = vmatpush1.msra.mxu0 0.0
    %1879 = vmatprep.subr.mxu0 0.0
    %1880 = vmatpush1.msra.mxu0 0.0
    %1881 = vmatprep.subr.mxu0 0.0
    %1882 = vmatpush1.msra.mxu0 0.0
    %1883 = vmatprep.subr.mxu0 0.0
    %1884 = vmatpush1.msra.mxu0 0.0
    %1885 = vmatprep.subr.mxu0 0.0
    %1886 = vmatpush1.msra.mxu0 0.0
    %1887 = vmatprep.subr.mxu0 0.0
    %1888 = vmatpush1.msra.mxu0 0.0
    %1889 = vmatprep.subr.mxu0 0.0
    %1890 = vmatpush1.msra.mxu0 0.0
    %1891 = vmatprep.subr.mxu0 0.0
    %1892 = vmatpush1.msra.mxu0 0.0
    %1893 = vmatprep.subr.mxu0 0.0
    %1894 = vmatpush1.msra.mxu0 0.0
    %1895 = vmatprep.subr.mxu0 0.0
    %1896 = vmatpush1.msra.mxu0 0.0
    %1897 = vmatprep.subr.mxu0 0.0
    %1898 = vmatpush1.msra.mxu0 0.0
    %1899 = vmatprep.subr.mxu0 0.0
    %1900 = vmatpush1.msra.mxu0 0.0
    %1901 = vmatprep.subr.mxu0 0.0
    %1902 = vmatpush1.msra.mxu0 0.0
    %1903 = vmatprep.subr.mxu0 0.0
    %1904 = vmatpush1.msra.mxu0 0.0
    %1905 = vmatprep.subr.mxu0 0.0
    %1906 = vmatpush1.msra.mxu0 0.0
    %1907 = vmatprep.subr.mxu0 0.0
    %1908 = vmatpush1.msra.mxu0 0.0
    %1909 = vmatprep.subr.mxu0 0.0
    %1910 = vmatpush1.msra.mxu0 0.0
    %1911 = vmatprep.subr.mxu0 0.0
    %1912 = vmatpush1.msra.mxu0 0.0
    %1913 = vmatprep.subr.mxu0 0.0
    %1914 = vmatpush1.msra.mxu0 0.0
    %1915 = vmatprep.subr.mxu0 0.0
    %1916 = vmatpush1.msra.mxu0 0.0
    %1917 = vmatprep.subr.mxu0 0.0
    %1918 = vmatpush1.msra.mxu0 0.0
    %1919 = vmatprep.subr.mxu0 0.0
    %1920 = vmatpush1.msra.mxu0 0.0
    %1921 = vmatprep.mubr.f32.mxu0 0.0
    %1922 = vmatmul.mubr.f32.gmra.mrb[0].mxu0 %v1855
    %v1923 = vpop.f32.mrb[0].mxu0
    %v1924 = vadd.f32 0.0, %v1923
    %v1925 = vpop.f32.mrb[0].mxu0
    %v1926 = vadd.f32 0.0, %v1925
    %1927 = vdwg.mxu0
    %v1930 = vrot.slane %v1924, 2
    %v1931 = vrot.slane %v1926, 2
    %v1934 = vadd.f32 %v1117, %v1930
    %v1935 = vadd.f32 %v1119, %v1931
    %v1936 = vxor.u32 %v1934, 2147483648
    %v1937 = vxor.u32 %v1935, 2147483648
    %v1938 = vmul.f32 %v1936, 1.442695
    %v1939 = vpow.pop %v1938
    %v1940 = vmul.f32 %v1937, 1.442695
    %v1941 = vpow.pop %v1940
    %v1942 = vadd.f32 %v1939, 1.0
    %v1943 = vadd.f32 %v1941, 1.0
    %v1944 = vrcp.pop %v1942
    %v1945 = vmul.f32 1.0, %v1944
    %v1946 = vrcp.pop %v1943
    %v1947 = vmul.f32 1.0, %v1946
    %v1948 = vtanh.pop %v1935
    %v1950 = vrot.slane %v1843, 6
    %v1952 = vmul.f32 %v1945, %v1950
    %v1953 = vmul.f32 %v1945, %v1948
    %1955 = vrot.lane.b32.xlu0 %v1953, 64
    %v1956 = vpop.permute.xlu0 %1955
    %v1958 = vadd.f32 %v1952, %v1956
    %v1959 = vtanh.pop %v1958
    %v1960 = vmul.f32 %v1947, %v1959
    %v1961 = vmul.f32 %v1618, %v1960
    %v1963 = vrot.slane %v1961, 6
    %v1965 = vadd.f32 %v1850, %v1963
    %1967 = vrot.lane.b32.xlu0 %v1965, 64
    %v1968 = vpop.permute.xlu0 %1967
    %vm1970 = vcmask 517120
    %1971 = vst.msk [vmem:[#allocation4] sm:$0x3] %vm1970, %v1968
    // Predicated region
    $region46: #{model_forward.1} parent=1 // pred_check
      _
    $region47: #{model_forward.1} parent=1 // pred_check_branch
      %1973 = sbr.rel (0) target = $region49
    $region48: #{model_forward.1} parent=1 // pred_region
      %s1975 = ssub.s32 32, 32
      %1976 = vsyncadd [#allocation3], %s1975
      %s1978 = sshll.u32 [#allocation2], 4
      %s1979 = int_to_ptr.vmem [resolvable:$true] %s1978
      %1981 = dma.vmem_to_hbm [thread:$0]  %s1979, 32, %s11, [#allocation3]
    $region49: #{model_forward.1} parent=1 // pred_fallthru
      _
    // Predicated region
    $region50: #{model_forward.1} parent=1 // pred_check
      _
    $region51: #{model_forward.1} parent=1 // pred_check_branch
      %1983 = sbr.rel (0) target = $region53
    $region52: #{model_forward.1} parent=1 // pred_region
      %s1985 = ssub.s32 32, 32
      %1986 = vsyncadd [#allocation5], %s1985
      %s1988 = sshll.u32 [#allocation4], 4
      %s1989 = int_to_ptr.vmem [resolvable:$true] %s1988
      %1991 = dma.vmem_to_hbm [thread:$0]  %s1989, 32, %s12, [#allocation5]
    $region53: #{model_forward.1} parent=1 // pred_fallthru
      _
    // Predicated region
    $region54: #{model_forward.1} parent=1 // pred_check
      _
    $region55: #{model_forward.1} parent=1 // pred_check_branch
      %1993 = sbr.rel (0) target = $region57
    $region56: #{model_forward.1} parent=1 // pred_region
      %1994 = dma.done [#allocation3], 32
    $region57: #{model_forward.1} parent=1 // pred_fallthru
      _
    // Predicated region
    $region58: #{model_forward.1} parent=1 // pred_check
      _
    $region59: #{model_forward.1} parent=1 // pred_check_branch
      %1996 = sbr.rel (0) target = $region61
    $region60: #{model_forward.1} parent=1 // pred_region
      %1997 = dma.done [#allocation5], 32
    $region61: #{model_forward.1} parent=1 // pred_fallthru
      _
    %1998 = vsyncpa [#allocation3], 1
    %1999 = vsyncpa [#allocation5], 1

</llo_original>
